<compile_context>
chip_gen: v7x
topology: tpu7x:2x2x1
jax: 0.10.0
libtpu: 0.0.40
codegen_flags: <defaults>
</compile_context>

<pallas_src>
import jax
import jax.numpy as jnp
from jax import lax
from jax.experimental import pallas as pl
from jax.experimental.pallas import tpu as pltpu


def _offsets(k):
    r = k // 2
    return [d for d in range(-r, r + 1) if d != 0]


def _vmem_limit_bytes():
    """Per-chip VMEM limit: ~60% of physical capacity, capped at 96 MiB."""
    try:
        info = pltpu.get_tpu_info()
        cap = int(getattr(info, "vmem_capacity_bytes", 64 * 1024 * 1024))
    except Exception:  # conservative (v7x-sized) fallback
        cap = 64 * 1024 * 1024
    return max(32 * 1024 * 1024, min(int(0.6 * cap), 96 * 1024 * 1024))


def _make_sppf_kernel(H, W, c_, k, matmul_dtype):
    HW = H * W
    offs = _offsets(k)
    n_off = len(offs)
    neg_inf = float("-inf")

    def kernel(x_ref, w1_ref, b1_ref, w2_ref, b2_ref, o_ref):
        # x_ref: (c1, HW)  w1_ref: (c_, c1)  b1_ref: (c_, 1)
        # w2_ref: (4, c2, c_)  b2_ref: (c2, 1)  o_ref: (c2, HW)

        # --- boundary masks, built once per block from a lane iota and hoisted so
        #     all three pools reuse them (no HBM mask stream, no repeated broadcasts)
        pos = lax.broadcasted_iota(jnp.int32, (1, HW), 1)
        col = pos % W
        masks = []
        for d in offs:                                    # shifts along W
            valid = (col + d >= 0) & (col + d < W)
            masks.append(jnp.where(valid, 0.0, neg_inf))
        for d in offs:                                    # shifts along H
            valid = (pos + d * W >= 0) & (pos + d * W < HW)
            masks.append(jnp.where(valid, 0.0, neg_inf))
        masks = [jnp.broadcast_to(m.astype(jnp.float32), (c_, HW)) for m in masks]

        # --- cv1: fused 1x1 conv + BN (MXU, f32 accumulate), then SiLU
        y = jnp.dot(w1_ref[...], x_ref[...], preferred_element_type=jnp.float32)
        y = y + b1_ref[...]
        y = y * jax.nn.sigmoid(y)                         # (c_, HW), f32

        w2 = w2_ref[...]                                  # (4, c2, c_)
        acc = jnp.dot(w2[0], y.astype(matmul_dtype),
                      preferred_element_type=jnp.float32)

        def pool(z):
            # separable k x k, stride 1, pad k//2 max pool (pad value = -inf).
            # pltpu.roll keeps shifts on the XLU; the additive -inf masks kill
            # exactly the wrapped / out-of-image positions (incl. roll wraparound).
            cm = z
            for j, d in enumerate(offs):                  # along W (lane axis)
                shifted = pltpu.roll(z, (-d) % HW, axis=1)
                cm = jnp.maximum(cm, shifted + masks[j])
            out = cm
            for j, d in enumerate(offs):                  # along H (stride W on lanes)
                shifted = pltpu.roll(cm, (-d * W) % HW, axis=1)
                out = jnp.maximum(out, shifted + masks[n_off + j])
            return out

        for t in range(1, 4):
            y = pool(y)
            acc = acc + jnp.dot(w2[t], y.astype(matmul_dtype),
                                preferred_element_type=jnp.float32)

        # --- cv2: fused BN bias + SiLU; output lane axis = HW (lane-dense stores)
        z = acc + b2_ref[...]
        o_ref[...] = (z * jax.nn.sigmoid(z)).astype(o_ref.dtype)

    return kernel


def sppf_forward(x_nchw, w1f, b1f, w2f, b2f, k=5, matmul_dtype=jnp.bfloat16):
    """SPPF forward with BatchNorm already fused into the 1x1 convs.

    x_nchw: (B, c1, H, W);  w1f: (c_, c1);  b1f: (c_,);  w2f: (c2, 4*c_);  b2f: (c2,).
    """
    assert k % 2 == 1, "SPPF max pool kernel size must be odd"
    B, c1, H, W = x_nchw.shape
    c_ = w1f.shape[0]
    c2 = w2f.shape[0]
    assert w1f.shape == (c_, c1) and w2f.shape == (c2, 4 * c_)
    HW = H * W

    # Channels-first, spatial flattened on the lane axis: pure reshapes, no transpose.
    x_r = x_nchw.reshape(B, c1, HW).astype(matmul_dtype)
    w1c = w1f.astype(matmul_dtype)
    # Fold the channel concat into cv2: (c2, 4*c_) -> (4, c2, c_) per-branch chunks.
    w2c = jnp.transpose(w2f.reshape(c2, 4, c_), (1, 0, 2)).astype(matmul_dtype)
    b1r = b1f.reshape(c_, 1).astype(jnp.float32)
    b2r = b2f.reshape(c2, 1).astype(jnp.float32)

    kernel = _make_sppf_kernel(H, W, c_, k, matmul_dtype)
    vmem_limit = _vmem_limit_bytes()

    def build(single_buffer_weights):
        def wspec(shape):
            idx = lambda b, _n=len(shape): (0,) * _n
            if single_buffer_weights:
                return pl.BlockSpec(shape, idx, pipeline_mode=pl.Buffered(1))
            return pl.BlockSpec(shape, idx)

        return pl.pallas_call(
            kernel,
            out_shape=jax.ShapeDtypeStruct((B, c2, HW), x_nchw.dtype),
            grid=(B,),
            in_specs=[
                pl.BlockSpec((None, c1, HW), lambda b: (b, 0, 0)),   # one image / step
                wspec((c_, c1)),                                     # cv1 weight
                wspec((c_, 1)),                                      # cv1 bias
                wspec((4, c2, c_)),                                  # cv2 weight chunks
                wspec((c2, 1)),                                      # cv2 bias
            ],
            out_specs=pl.BlockSpec((None, c2, HW), lambda b: (b, 0, 0)),
            compiler_params=pltpu.CompilerParams(
                dimension_semantics=("parallel",),
                vmem_limit_bytes=vmem_limit,
            ),
        )

    # Grid-invariant weights only need one VMEM buffer; fall back to the default
    # double-buffered specs if this JAX build rejects pl.Buffered(1).
    try:
        if not hasattr(pl, "Buffered"):
            raise AttributeError("pl.Buffered unavailable")
        out = build(True)(x_r, w1c, b1r, w2c, b2r)
    except Exception:
        out = build(False)(x_r, w1c, b1r, w2c, b2r)

    # TODO(synk): for B == 1 add H-slab (halo) tiling so the grid has >=2 steps and
    # both v7x TensorCores / the DMA pipeline stay engaged.
    return out.reshape(B, c2, H, W)


def fuse_conv_bn(w, gamma, beta, mean, var, eps=1e-5):
    """Fold eval-mode BatchNorm into a bias-free 1x1 conv.
    w: (c_out, c_in) PyTorch-layout weight -> (c_out, c_in) fused weight + (c_out,) bias."""
    scale = gamma / jnp.sqrt(var + eps)
    w_fused = (w * scale[:, None]).astype(jnp.float32)
    b_fused = (beta - mean * scale).astype(jnp.float32)
    return w_fused, b_fused


def sppf_ref(x, w1, g1, be1, m1, v1, w2, g2, be2, m2, v2, k=5, eps=1e-5):
    """Pure-JAX reference mirroring the PyTorch SPPF forward (eval mode)."""
    def conv_bn_silu(t, w, g, b, mu, var):
        y = jnp.einsum('oc,bchw->bohw', w, t)
        s = g / jnp.sqrt(var + eps)
        y = y * s[None, :, None, None] + (b - mu * s)[None, :, None, None]
        return y * jax.nn.sigmoid(y)

    def maxpool(t):
        p = k // 2
        return lax.reduce_window(t, -jnp.inf, lax.max,
                                 (1, 1, k, k), (1, 1, 1, 1),
                                 [(0, 0), (0, 0), (p, p), (p, p)])

    y0 = conv_bn_silu(x, w1, g1, be1, m1, v1)
    y1 = maxpool(y0)
    y2 = maxpool(y1)
    y3 = maxpool(y2)
    cat = jnp.concatenate([y0, y1, y2, y3], axis=1)
    return conv_bn_silu(cat, w2, g2, be2, m2, v2)


if __name__ == "__main__":
    B, c1, c2, H, W, k = 2, 4, 8, 16, 16, 5
    c_ = c1 // 2

    key = jax.random.PRNGKey(0)
    ks = jax.random.split(key, 11)
    x = jax.random.normal(ks[0], (B, c1, H, W), dtype=jnp.float32)
    # cv1 = Conv2d(c1, c_, 1, bias=False) + BN(c_) + SiLU
    w1 = 0.5 * jax.random.normal(ks[1], (c_, c1), jnp.float32)
    g1 = 1.0 + 0.1 * jax.random.normal(ks[2], (c_,), jnp.float32)
    be1 = 0.1 * jax.random.normal(ks[3], (c_,), jnp.float32)
    m1 = 0.1 * jax.random.normal(ks[4], (c_,), jnp.float32)
    v1 = 0.5 + jnp.abs(jax.random.normal(ks[5], (c_,), jnp.float32))
    # cv2 = Conv2d(4*c_, c2, 1, bias=False) + BN(c2) + SiLU
    w2 = 0.25 * jax.random.normal(ks[6], (c2, 4 * c_), jnp.float32)
    g2 = 1.0 + 0.1 * jax.random.normal(ks[7], (c2,), jnp.float32)
    be2 = 0.1 * jax.random.normal(ks[8], (c2,), jnp.float32)
    m2 = 0.1 * jax.random.normal(ks[9], (c2,), jnp.float32)
    v2 = 0.5 + jnp.abs(jax.random.normal(ks[10], (c2,), jnp.float32))

    w1f, b1f = fuse_conv_bn(w1, g1, be1, m1, v1)
    w2f, b2f = fuse_conv_bn(w2, g2, be2, m2, v2)

    ref = sppf_ref(x, w1, g1, be1, m1, v1, w2, g2, be2, m2, v2, k=k)

    # Strict numerics check: f32 matmul path.
    out_f32 = sppf_forward(x, w1f, b1f, w2f, b2f, k=k, matmul_dtype=jnp.float32)
    out_f32 = jax.block_until_ready(out_f32)
    assert out_f32.shape == (B, c2, H, W)
    assert jnp.allclose(out_f32, ref, atol=1e-4, rtol=1e-4), "f32 path mismatch"

    # Fast path: bf16 matmuls (default) — tolerance loosened for bf16 rounding.
    out = sppf_forward(x, w1f, b1f, w2f, b2f, k=k)
    out = jax.block_until_ready(out)
    assert out.shape == (B, c2, H, W)
    assert jnp.allclose(out, ref, atol=1e-1, rtol=1e-1), "bf16 path mismatch"

    print("KERNEL_OK")
</pallas_src>

<mosaic_0001>
module attributes {stable_mosaic.version = 11 : i64} {
  func.func @kernel(%arg0: i32, %arg1: memref<1x4x256xf32, #tpu.memory_space<vmem>>, %arg2: memref<2x4xf32, #tpu.memory_space<vmem>>, %arg3: memref<2x1xf32, #tpu.memory_space<vmem>>, %arg4: memref<4x8x2xf32, #tpu.memory_space<vmem>>, %arg5: memref<8x1xf32, #tpu.memory_space<vmem>>, %arg6: memref<1x8x256xf32, #tpu.memory_space<vmem>>) attributes {dimension_semantics = [#tpu.dimension_semantics<parallel>], iteration_bounds = array<i64: 2>, scalar_prefetch = 0 : i64, scratch_operands = 0 : i64, tpu.core_type = #tpu.core_type<tc>, window_params = [{transform_indices = @transform_0, window_bounds = array<i64: 1, 4, 256>}, {pipeline_mode = #tpu.pipeline_mode<synchronous>, transform_indices = @transform_1, window_bounds = array<i64: 2, 4>}, {pipeline_mode = #tpu.pipeline_mode<synchronous>, transform_indices = @transform_2, window_bounds = array<i64: 2, 1>}, {pipeline_mode = #tpu.pipeline_mode<synchronous>, transform_indices = @transform_3, window_bounds = array<i64: 4, 8, 2>}, {pipeline_mode = #tpu.pipeline_mode<synchronous>, transform_indices = @transform_4, window_bounds = array<i64: 8, 1>}, {transform_indices = @transform_5, window_bounds = array<i64: 1, 8, 256>}]} {
    %0 = tpu.iota {dimensions = array<i32: 1>} : vector<1x256xi32>
    %c16_i32 = arith.constant 16 : i32
    %c0_i32 = arith.constant 0 : i32
    %1 = arith.cmpi eq, %c16_i32, %c0_i32 : i32
    %c1_i32 = arith.constant 1 : i32
    %2 = arith.select %1, %c1_i32, %c16_i32 : i32
    %3 = vector.broadcast %2 : i32 to vector<1x256xi32>
    %4 = arith.remsi %0, %3 : vector<1x256xi32>
    %c0_i32_0 = arith.constant 0 : i32
    %5 = vector.broadcast %c0_i32_0 : i32 to vector<1x256xi32>
    %6 = arith.cmpi ne, %4, %5 : vector<1x256xi32>
    %c0_i32_1 = arith.constant 0 : i32
    %7 = vector.broadcast %c0_i32_1 : i32 to vector<1x256xi32>
    %8 = arith.cmpi slt, %4, %7 : vector<1x256xi32>
    %c0_i32_2 = arith.constant 0 : i32
    %9 = arith.cmpi slt, %2, %c0_i32_2 : i32
    %10 = vector.broadcast %9 : i1 to vector<1x256xi1>
    %11 = vector.broadcast %10 : vector<1x256xi1> to vector<1x256xi1>
    %12 = arith.xori %8, %11 : vector<1x256xi1>
    %13 = arith.andi %12, %6 : vector<1x256xi1>
    %14 = vector.broadcast %2 : i32 to vector<1x256xi32>
    %15 = arith.addi %4, %14 : vector<1x256xi32>
    %16 = arith.select %13, %15, %4 : vector<1x256xi1>, vector<1x256xi32>
    %c-2_i32 = arith.constant -2 : i32
    %17 = vector.broadcast %c-2_i32 : i32 to vector<1x256xi32>
    %18 = arith.addi %16, %17 : vector<1x256xi32>
    %c0_i32_3 = arith.constant 0 : i32
    %19 = vector.broadcast %c0_i32_3 : i32 to vector<1x256xi32>
    %20 = arith.cmpi sge, %18, %19 : vector<1x256xi32>
    %c-2_i32_4 = arith.constant -2 : i32
    %21 = vector.broadcast %c-2_i32_4 : i32 to vector<1x256xi32>
    %22 = arith.addi %16, %21 : vector<1x256xi32>
    %c16_i32_5 = arith.constant 16 : i32
    %23 = vector.broadcast %c16_i32_5 : i32 to vector<1x256xi32>
    %24 = arith.cmpi slt, %22, %23 : vector<1x256xi32>
    %25 = arith.andi %20, %24 : vector<1x256xi1>
    %cst = arith.constant 0.000000e+00 : f32
    %cst_6 = arith.constant 0xFF800000 : f32
    %26 = vector.broadcast %cst : f32 to vector<1x256xf32>
    %27 = vector.broadcast %cst_6 : f32 to vector<1x256xf32>
    %28 = arith.select %25, %26, %27 : vector<1x256xi1>, vector<1x256xf32>
    %c-1_i32 = arith.constant -1 : i32
    %29 = vector.broadcast %c-1_i32 : i32 to vector<1x256xi32>
    %30 = arith.addi %16, %29 : vector<1x256xi32>
    %c0_i32_7 = arith.constant 0 : i32
    %31 = vector.broadcast %c0_i32_7 : i32 to vector<1x256xi32>
    %32 = arith.cmpi sge, %30, %31 : vector<1x256xi32>
    %c-1_i32_8 = arith.constant -1 : i32
    %33 = vector.broadcast %c-1_i32_8 : i32 to vector<1x256xi32>
    %34 = arith.addi %16, %33 : vector<1x256xi32>
    %c16_i32_9 = arith.constant 16 : i32
    %35 = vector.broadcast %c16_i32_9 : i32 to vector<1x256xi32>
    %36 = arith.cmpi slt, %34, %35 : vector<1x256xi32>
    %37 = arith.andi %32, %36 : vector<1x256xi1>
    %cst_10 = arith.constant 0.000000e+00 : f32
    %cst_11 = arith.constant 0xFF800000 : f32
    %38 = vector.broadcast %cst_10 : f32 to vector<1x256xf32>
    %39 = vector.broadcast %cst_11 : f32 to vector<1x256xf32>
    %40 = arith.select %37, %38, %39 : vector<1x256xi1>, vector<1x256xf32>
    %c1_i32_12 = arith.constant 1 : i32
    %41 = vector.broadcast %c1_i32_12 : i32 to vector<1x256xi32>
    %42 = arith.addi %16, %41 : vector<1x256xi32>
    %c0_i32_13 = arith.constant 0 : i32
    %43 = vector.broadcast %c0_i32_13 : i32 to vector<1x256xi32>
    %44 = arith.cmpi sge, %42, %43 : vector<1x256xi32>
    %c1_i32_14 = arith.constant 1 : i32
    %45 = vector.broadcast %c1_i32_14 : i32 to vector<1x256xi32>
    %46 = arith.addi %16, %45 : vector<1x256xi32>
    %c16_i32_15 = arith.constant 16 : i32
    %47 = vector.broadcast %c16_i32_15 : i32 to vector<1x256xi32>
    %48 = arith.cmpi slt, %46, %47 : vector<1x256xi32>
    %49 = arith.andi %44, %48 : vector<1x256xi1>
    %cst_16 = arith.constant 0.000000e+00 : f32
    %cst_17 = arith.constant 0xFF800000 : f32
    %50 = vector.broadcast %cst_16 : f32 to vector<1x256xf32>
    %51 = vector.broadcast %cst_17 : f32 to vector<1x256xf32>
    %52 = arith.select %49, %50, %51 : vector<1x256xi1>, vector<1x256xf32>
    %c2_i32 = arith.constant 2 : i32
    %53 = vector.broadcast %c2_i32 : i32 to vector<1x256xi32>
    %54 = arith.addi %16, %53 : vector<1x256xi32>
    %c0_i32_18 = arith.constant 0 : i32
    %55 = vector.broadcast %c0_i32_18 : i32 to vector<1x256xi32>
    %56 = arith.cmpi sge, %54, %55 : vector<1x256xi32>
    %c2_i32_19 = arith.constant 2 : i32
    %57 = vector.broadcast %c2_i32_19 : i32 to vector<1x256xi32>
    %58 = arith.addi %16, %57 : vector<1x256xi32>
    %c16_i32_20 = arith.constant 16 : i32
    %59 = vector.broadcast %c16_i32_20 : i32 to vector<1x256xi32>
    %60 = arith.cmpi slt, %58, %59 : vector<1x256xi32>
    %61 = arith.andi %56, %60 : vector<1x256xi1>
    %cst_21 = arith.constant 0.000000e+00 : f32
    %cst_22 = arith.constant 0xFF800000 : f32
    %62 = vector.broadcast %cst_21 : f32 to vector<1x256xf32>
    %63 = vector.broadcast %cst_22 : f32 to vector<1x256xf32>
    %64 = arith.select %61, %62, %63 : vector<1x256xi1>, vector<1x256xf32>
    %c-32_i32 = arith.constant -32 : i32
    %65 = vector.broadcast %c-32_i32 : i32 to vector<1x256xi32>
    %66 = arith.addi %0, %65 : vector<1x256xi32>
    %c0_i32_23 = arith.constant 0 : i32
    %67 = vector.broadcast %c0_i32_23 : i32 to vector<1x256xi32>
    %68 = arith.cmpi sge, %66, %67 : vector<1x256xi32>
    %c-32_i32_24 = arith.constant -32 : i32
    %69 = vector.broadcast %c-32_i32_24 : i32 to vector<1x256xi32>
    %70 = arith.addi %0, %69 : vector<1x256xi32>
    %c256_i32 = arith.constant 256 : i32
    %71 = vector.broadcast %c256_i32 : i32 to vector<1x256xi32>
    %72 = arith.cmpi slt, %70, %71 : vector<1x256xi32>
    %73 = arith.andi %68, %72 : vector<1x256xi1>
    %cst_25 = arith.constant 0.000000e+00 : f32
    %cst_26 = arith.constant 0xFF800000 : f32
    %74 = vector.broadcast %cst_25 : f32 to vector<1x256xf32>
    %75 = vector.broadcast %cst_26 : f32 to vector<1x256xf32>
    %76 = arith.select %73, %74, %75 : vector<1x256xi1>, vector<1x256xf32>
    %c-16_i32 = arith.constant -16 : i32
    %77 = vector.broadcast %c-16_i32 : i32 to vector<1x256xi32>
    %78 = arith.addi %0, %77 : vector<1x256xi32>
    %c0_i32_27 = arith.constant 0 : i32
    %79 = vector.broadcast %c0_i32_27 : i32 to vector<1x256xi32>
    %80 = arith.cmpi sge, %78, %79 : vector<1x256xi32>
    %c-16_i32_28 = arith.constant -16 : i32
    %81 = vector.broadcast %c-16_i32_28 : i32 to vector<1x256xi32>
    %82 = arith.addi %0, %81 : vector<1x256xi32>
    %c256_i32_29 = arith.constant 256 : i32
    %83 = vector.broadcast %c256_i32_29 : i32 to vector<1x256xi32>
    %84 = arith.cmpi slt, %82, %83 : vector<1x256xi32>
    %85 = arith.andi %80, %84 : vector<1x256xi1>
    %cst_30 = arith.constant 0.000000e+00 : f32
    %cst_31 = arith.constant 0xFF800000 : f32
    %86 = vector.broadcast %cst_30 : f32 to vector<1x256xf32>
    %87 = vector.broadcast %cst_31 : f32 to vector<1x256xf32>
    %88 = arith.select %85, %86, %87 : vector<1x256xi1>, vector<1x256xf32>
    %c16_i32_32 = arith.constant 16 : i32
    %89 = vector.broadcast %c16_i32_32 : i32 to vector<1x256xi32>
    %90 = arith.addi %0, %89 : vector<1x256xi32>
    %c0_i32_33 = arith.constant 0 : i32
    %91 = vector.broadcast %c0_i32_33 : i32 to vector<1x256xi32>
    %92 = arith.cmpi sge, %90, %91 : vector<1x256xi32>
    %c16_i32_34 = arith.constant 16 : i32
    %93 = vector.broadcast %c16_i32_34 : i32 to vector<1x256xi32>
    %94 = arith.addi %0, %93 : vector<1x256xi32>
    %c256_i32_35 = arith.constant 256 : i32
    %95 = vector.broadcast %c256_i32_35 : i32 to vector<1x256xi32>
    %96 = arith.cmpi slt, %94, %95 : vector<1x256xi32>
    %97 = arith.andi %92, %96 : vector<1x256xi1>
    %cst_36 = arith.constant 0.000000e+00 : f32
    %cst_37 = arith.constant 0xFF800000 : f32
    %98 = vector.broadcast %cst_36 : f32 to vector<1x256xf32>
    %99 = vector.broadcast %cst_37 : f32 to vector<1x256xf32>
    %100 = arith.select %97, %98, %99 : vector<1x256xi1>, vector<1x256xf32>
    %c32_i32 = arith.constant 32 : i32
    %101 = vector.broadcast %c32_i32 : i32 to vector<1x256xi32>
    %102 = arith.addi %0, %101 : vector<1x256xi32>
    %c0_i32_38 = arith.constant 0 : i32
    %103 = vector.broadcast %c0_i32_38 : i32 to vector<1x256xi32>
    %104 = arith.cmpi sge, %102, %103 : vector<1x256xi32>
    %c32_i32_39 = arith.constant 32 : i32
    %105 = vector.broadcast %c32_i32_39 : i32 to vector<1x256xi32>
    %106 = arith.addi %0, %105 : vector<1x256xi32>
    %c256_i32_40 = arith.constant 256 : i32
    %107 = vector.broadcast %c256_i32_40 : i32 to vector<1x256xi32>
    %108 = arith.cmpi slt, %106, %107 : vector<1x256xi32>
    %109 = arith.andi %104, %108 : vector<1x256xi1>
    %cst_41 = arith.constant 0.000000e+00 : f32
    %cst_42 = arith.constant 0xFF800000 : f32
    %110 = vector.broadcast %cst_41 : f32 to vector<1x256xf32>
    %111 = vector.broadcast %cst_42 : f32 to vector<1x256xf32>
    %112 = arith.select %109, %110, %111 : vector<1x256xi1>, vector<1x256xf32>
    %113 = vector.shape_cast %28 : vector<1x256xf32> to vector<1x256xf32>
    %114 = vector.broadcast %113 : vector<1x256xf32> to vector<2x256xf32>
    %115 = vector.shape_cast %40 : vector<1x256xf32> to vector<1x256xf32>
    %116 = vector.broadcast %115 : vector<1x256xf32> to vector<2x256xf32>
    %117 = vector.shape_cast %52 : vector<1x256xf32> to vector<1x256xf32>
    %118 = vector.broadcast %117 : vector<1x256xf32> to vector<2x256xf32>
    %119 = vector.shape_cast %64 : vector<1x256xf32> to vector<1x256xf32>
    %120 = vector.broadcast %119 : vector<1x256xf32> to vector<2x256xf32>
    %121 = vector.shape_cast %76 : vector<1x256xf32> to vector<1x256xf32>
    %122 = vector.broadcast %121 : vector<1x256xf32> to vector<2x256xf32>
    %123 = vector.shape_cast %88 : vector<1x256xf32> to vector<1x256xf32>
    %124 = vector.broadcast %123 : vector<1x256xf32> to vector<2x256xf32>
    %125 = vector.shape_cast %100 : vector<1x256xf32> to vector<1x256xf32>
    %126 = vector.broadcast %125 : vector<1x256xf32> to vector<2x256xf32>
    %127 = vector.shape_cast %112 : vector<1x256xf32> to vector<1x256xf32>
    %128 = vector.broadcast %127 : vector<1x256xf32> to vector<2x256xf32>
    %c0 = arith.constant 0 : index
    %c0_43 = arith.constant 0 : index
    %129 = vector.load %arg2[%c0, %c0_43] : memref<2x4xf32, #tpu.memory_space<vmem>>, vector<2x4xf32>
    %c0_44 = arith.constant 0 : index
    %c0_45 = arith.constant 0 : index
    %c0_46 = arith.constant 0 : index
    %130 = vector.load %arg1[%c0_44, %c0_45, %c0_46] : memref<1x4x256xf32, #tpu.memory_space<vmem>>, vector<1x4x256xf32>
    %131 = vector.shape_cast %130 : vector<1x4x256xf32> to vector<4x256xf32>
    %cst_47 = arith.constant dense<0.000000e+00> : vector<2x256xf32>
    %132 = tpu.matmul %129, %131, %cst_47 {dimension_numbers = #tpu.dot_dimension_numbers<[1], [0], [0], [1], [0, 0, 1, 1], [], []>} : vector<2x4xf32>, vector<4x256xf32>, vector<2x256xf32> -> vector<2x256xf32>
    %c0_48 = arith.constant 0 : index
    %c0_49 = arith.constant 0 : index
    %133 = vector.load %arg3[%c0_48, %c0_49] : memref<2x1xf32, #tpu.memory_space<vmem>>, vector<2x1xf32>
    %134 = vector.broadcast %133 : vector<2x1xf32> to vector<2x256xf32>
    %135 = arith.addf %132, %134 : vector<2x256xf32>
    %136 = arith.negf %135 : vector<2x256xf32>
    %137 = math.exp %136 : vector<2x256xf32>
    %cst_50 = arith.constant 1.000000e+00 : f32
    %138 = vector.broadcast %cst_50 : f32 to vector<2x256xf32>
    %139 = arith.addf %138, %137 : vector<2x256xf32>
    %140 = arith.divf %138, %139 : vector<2x256xf32>
    %141 = arith.mulf %135, %140 : vector<2x256xf32>
    %c0_51 = arith.constant 0 : index
    %c0_52 = arith.constant 0 : index
    %c0_53 = arith.constant 0 : index
    %142 = vector.load %arg4[%c0_51, %c0_52, %c0_53] : memref<4x8x2xf32, #tpu.memory_space<vmem>>, vector<4x8x2xf32>
    %143 = vector.extract_strided_slice %142 {offsets = [0, 0, 0], sizes = [1, 8, 2], strides = [1, 1, 1]} : vector<4x8x2xf32> to vector<1x8x2xf32>
    %144 = vector.shape_cast %143 : vector<1x8x2xf32> to vector<8x2xf32>
    %cst_54 = arith.constant dense<0.000000e+00> : vector<8x256xf32>
    %145 = tpu.matmul %144, %141, %cst_54 {dimension_numbers = #tpu.dot_dimension_numbers<[1], [0], [0], [1], [0, 0, 1, 1], [], []>} : vector<8x2xf32>, vector<2x256xf32>, vector<8x256xf32> -> vector<8x256xf32>
    %c2_i32_55 = arith.constant 2 : i32
    %146 = tpu.dynamic_rotate %141 by %c2_i32_55 dim 1 : vector<2x256xf32>, i32 -> vector<2x256xf32>
    %147 = arith.addf %146, %114 : vector<2x256xf32>
    %148 = arith.maximumf %141, %147 : vector<2x256xf32>
    %c1_i32_56 = arith.constant 1 : i32
    %149 = tpu.dynamic_rotate %141 by %c1_i32_56 dim 1 : vector<2x256xf32>, i32 -> vector<2x256xf32>
    %150 = arith.addf %149, %116 : vector<2x256xf32>
    %151 = arith.maximumf %148, %150 : vector<2x256xf32>
    %c255_i32 = arith.constant 255 : i32
    %152 = tpu.dynamic_rotate %141 by %c255_i32 dim 1 : vector<2x256xf32>, i32 -> vector<2x256xf32>
    %153 = arith.addf %152, %118 : vector<2x256xf32>
    %154 = arith.maximumf %151, %153 : vector<2x256xf32>
    %c254_i32 = arith.constant 254 : i32
    %155 = tpu.dynamic_rotate %141 by %c254_i32 dim 1 : vector<2x256xf32>, i32 -> vector<2x256xf32>
    %156 = arith.addf %155, %120 : vector<2x256xf32>
    %157 = arith.maximumf %154, %156 : vector<2x256xf32>
    %c32_i32_57 = arith.constant 32 : i32
    %158 = tpu.dynamic_rotate %157 by %c32_i32_57 dim 1 : vector<2x256xf32>, i32 -> vector<2x256xf32>
    %159 = arith.addf %158, %122 : vector<2x256xf32>
    %160 = arith.maximumf %157, %159 : vector<2x256xf32>
    %c16_i32_58 = arith.constant 16 : i32
    %161 = tpu.dynamic_rotate %157 by %c16_i32_58 dim 1 : vector<2x256xf32>, i32 -> vector<2x256xf32>
    %162 = arith.addf %161, %124 : vector<2x256xf32>
    %163 = arith.maximumf %160, %162 : vector<2x256xf32>
    %c240_i32 = arith.constant 240 : i32
    %164 = tpu.dynamic_rotate %157 by %c240_i32 dim 1 : vector<2x256xf32>, i32 -> vector<2x256xf32>
    %165 = arith.addf %164, %126 : vector<2x256xf32>
    %166 = arith.maximumf %163, %165 : vector<2x256xf32>
    %c224_i32 = arith.constant 224 : i32
    %167 = tpu.dynamic_rotate %157 by %c224_i32 dim 1 : vector<2x256xf32>, i32 -> vector<2x256xf32>
    %168 = arith.addf %167, %128 : vector<2x256xf32>
    %169 = arith.maximumf %166, %168 : vector<2x256xf32>
    %170 = vector.extract_strided_slice %142 {offsets = [1, 0, 0], sizes = [1, 8, 2], strides = [1, 1, 1]} : vector<4x8x2xf32> to vector<1x8x2xf32>
    %171 = vector.shape_cast %170 : vector<1x8x2xf32> to vector<8x2xf32>
    %cst_59 = arith.constant dense<0.000000e+00> : vector<8x256xf32>
    %172 = tpu.matmul %171, %169, %cst_59 {dimension_numbers = #tpu.dot_dimension_numbers<[1], [0], [0], [1], [0, 0, 1, 1], [], []>} : vector<8x2xf32>, vector<2x256xf32>, vector<8x256xf32> -> vector<8x256xf32>
    %173 = arith.addf %145, %172 : vector<8x256xf32>
    %c2_i32_60 = arith.constant 2 : i32
    %174 = tpu.dynamic_rotate %169 by %c2_i32_60 dim 1 : vector<2x256xf32>, i32 -> vector<2x256xf32>
    %175 = arith.addf %174, %114 : vector<2x256xf32>
    %176 = arith.maximumf %169, %175 : vector<2x256xf32>
    %c1_i32_61 = arith.constant 1 : i32
    %177 = tpu.dynamic_rotate %169 by %c1_i32_61 dim 1 : vector<2x256xf32>, i32 -> vector<2x256xf32>
    %178 = arith.addf %177, %116 : vector<2x256xf32>
    %179 = arith.maximumf %176, %178 : vector<2x256xf32>
    %c255_i32_62 = arith.constant 255 : i32
    %180 = tpu.dynamic_rotate %169 by %c255_i32_62 dim 1 : vector<2x256xf32>, i32 -> vector<2x256xf32>
    %181 = arith.addf %180, %118 : vector<2x256xf32>
    %182 = arith.maximumf %179, %181 : vector<2x256xf32>
    %c254_i32_63 = arith.constant 254 : i32
    %183 = tpu.dynamic_rotate %169 by %c254_i32_63 dim 1 : vector<2x256xf32>, i32 -> vector<2x256xf32>
    %184 = arith.addf %183, %120 : vector<2x256xf32>
    %185 = arith.maximumf %182, %184 : vector<2x256xf32>
    %c32_i32_64 = arith.constant 32 : i32
    %186 = tpu.dynamic_rotate %185 by %c32_i32_64 dim 1 : vector<2x256xf32>, i32 -> vector<2x256xf32>
    %187 = arith.addf %186, %122 : vector<2x256xf32>
    %188 = arith.maximumf %185, %187 : vector<2x256xf32>
    %c16_i32_65 = arith.constant 16 : i32
    %189 = tpu.dynamic_rotate %185 by %c16_i32_65 dim 1 : vector<2x256xf32>, i32 -> vector<2x256xf32>
    %190 = arith.addf %189, %124 : vector<2x256xf32>
    %191 = arith.maximumf %188, %190 : vector<2x256xf32>
    %c240_i32_66 = arith.constant 240 : i32
    %192 = tpu.dynamic_rotate %185 by %c240_i32_66 dim 1 : vector<2x256xf32>, i32 -> vector<2x256xf32>
    %193 = arith.addf %192, %126 : vector<2x256xf32>
    %194 = arith.maximumf %191, %193 : vector<2x256xf32>
    %c224_i32_67 = arith.constant 224 : i32
    %195 = tpu.dynamic_rotate %185 by %c224_i32_67 dim 1 : vector<2x256xf32>, i32 -> vector<2x256xf32>
    %196 = arith.addf %195, %128 : vector<2x256xf32>
    %197 = arith.maximumf %194, %196 : vector<2x256xf32>
    %198 = vector.extract_strided_slice %142 {offsets = [2, 0, 0], sizes = [1, 8, 2], strides = [1, 1, 1]} : vector<4x8x2xf32> to vector<1x8x2xf32>
    %199 = vector.shape_cast %198 : vector<1x8x2xf32> to vector<8x2xf32>
    %cst_68 = arith.constant dense<0.000000e+00> : vector<8x256xf32>
    %200 = tpu.matmul %199, %197, %cst_68 {dimension_numbers = #tpu.dot_dimension_numbers<[1], [0], [0], [1], [0, 0, 1, 1], [], []>} : vector<8x2xf32>, vector<2x256xf32>, vector<8x256xf32> -> vector<8x256xf32>
    %201 = arith.addf %173, %200 : vector<8x256xf32>
    %c2_i32_69 = arith.constant 2 : i32
    %202 = tpu.dynamic_rotate %197 by %c2_i32_69 dim 1 : vector<2x256xf32>, i32 -> vector<2x256xf32>
    %203 = arith.addf %202, %114 : vector<2x256xf32>
    %204 = arith.maximumf %197, %203 : vector<2x256xf32>
    %c1_i32_70 = arith.constant 1 : i32
    %205 = tpu.dynamic_rotate %197 by %c1_i32_70 dim 1 : vector<2x256xf32>, i32 -> vector<2x256xf32>
    %206 = arith.addf %205, %116 : vector<2x256xf32>
    %207 = arith.maximumf %204, %206 : vector<2x256xf32>
    %c255_i32_71 = arith.constant 255 : i32
    %208 = tpu.dynamic_rotate %197 by %c255_i32_71 dim 1 : vector<2x256xf32>, i32 -> vector<2x256xf32>
    %209 = arith.addf %208, %118 : vector<2x256xf32>
    %210 = arith.maximumf %207, %209 : vector<2x256xf32>
    %c254_i32_72 = arith.constant 254 : i32
    %211 = tpu.dynamic_rotate %197 by %c254_i32_72 dim 1 : vector<2x256xf32>, i32 -> vector<2x256xf32>
    %212 = arith.addf %211, %120 : vector<2x256xf32>
    %213 = arith.maximumf %210, %212 : vector<2x256xf32>
    %c32_i32_73 = arith.constant 32 : i32
    %214 = tpu.dynamic_rotate %213 by %c32_i32_73 dim 1 : vector<2x256xf32>, i32 -> vector<2x256xf32>
    %215 = arith.addf %214, %122 : vector<2x256xf32>
    %216 = arith.maximumf %213, %215 : vector<2x256xf32>
    %c16_i32_74 = arith.constant 16 : i32
    %217 = tpu.dynamic_rotate %213 by %c16_i32_74 dim 1 : vector<2x256xf32>, i32 -> vector<2x256xf32>
    %218 = arith.addf %217, %124 : vector<2x256xf32>
    %219 = arith.maximumf %216, %218 : vector<2x256xf32>
    %c240_i32_75 = arith.constant 240 : i32
    %220 = tpu.dynamic_rotate %213 by %c240_i32_75 dim 1 : vector<2x256xf32>, i32 -> vector<2x256xf32>
    %221 = arith.addf %220, %126 : vector<2x256xf32>
    %222 = arith.maximumf %219, %221 : vector<2x256xf32>
    %c224_i32_76 = arith.constant 224 : i32
    %223 = tpu.dynamic_rotate %213 by %c224_i32_76 dim 1 : vector<2x256xf32>, i32 -> vector<2x256xf32>
    %224 = arith.addf %223, %128 : vector<2x256xf32>
    %225 = arith.maximumf %222, %224 : vector<2x256xf32>
    %226 = vector.extract_strided_slice %142 {offsets = [3, 0, 0], sizes = [1, 8, 2], strides = [1, 1, 1]} : vector<4x8x2xf32> to vector<1x8x2xf32>
    %227 = vector.shape_cast %226 : vector<1x8x2xf32> to vector<8x2xf32>
    %cst_77 = arith.constant dense<0.000000e+00> : vector<8x256xf32>
    %228 = tpu.matmul %227, %225, %cst_77 {dimension_numbers = #tpu.dot_dimension_numbers<[1], [0], [0], [1], [0, 0, 1, 1], [], []>} : vector<8x2xf32>, vector<2x256xf32>, vector<8x256xf32> -> vector<8x256xf32>
    %229 = arith.addf %201, %228 : vector<8x256xf32>
    %c0_78 = arith.constant 0 : index
    %c0_79 = arith.constant 0 : index
    %230 = vector.load %arg5[%c0_78, %c0_79] : memref<8x1xf32, #tpu.memory_space<vmem>>, vector<8x1xf32>
    %231 = vector.broadcast %230 : vector<8x1xf32> to vector<8x256xf32>
    %232 = arith.addf %229, %231 : vector<8x256xf32>
    %233 = arith.negf %232 : vector<8x256xf32>
    %234 = math.exp %233 : vector<8x256xf32>
    %cst_80 = arith.constant 1.000000e+00 : f32
    %235 = vector.broadcast %cst_80 : f32 to vector<8x256xf32>
    %236 = arith.addf %235, %234 : vector<8x256xf32>
    %237 = arith.divf %235, %236 : vector<8x256xf32>
    %238 = arith.mulf %232, %237 : vector<8x256xf32>
    %c0_81 = arith.constant 0 : index
    %c0_82 = arith.constant 0 : index
    %c0_83 = arith.constant 0 : index
    %239 = vector.load %arg6[%c0_81, %c0_82, %c0_83] : memref<1x8x256xf32, #tpu.memory_space<vmem>>, vector<1x8x256xf32>
    %240 = vector.shape_cast %239 : vector<1x8x256xf32> to vector<8x256xf32>
    %241 = vector.shape_cast %238 : vector<8x256xf32> to vector<1x8x256xf32>
    tpu.vector_store %arg6[%c0_81, %c0_82, %c0_83], %241 {strides = array<i32>} : memref<1x8x256xf32, #tpu.memory_space<vmem>>, vector<1x8x256xf32>,
    return
  }
  func.func @transform_0(%arg0: i32) -> (i32, i32, i32) {
    %c0_i32 = arith.constant 0 : i32
    %c0_i32_0 = arith.constant 0 : i32
    %c0_i32_1 = arith.constant 0 : i32
    return %arg0, %c0_i32, %c0_i32_0 : i32, i32, i32
  }
  func.func @transform_1(%arg0: i32) -> (i32, i32) {
    %c0_i32 = arith.constant 0 : i32
    %c0_i32_0 = arith.constant 0 : i32
    %c0_i32_1 = arith.constant 0 : i32
    return %c0_i32, %c0_i32_0 : i32, i32
  }
  func.func @transform_2(%arg0: i32) -> (i32, i32) {
    %c0_i32 = arith.constant 0 : i32
    %c0_i32_0 = arith.constant 0 : i32
    %c0_i32_1 = arith.constant 0 : i32
    return %c0_i32, %c0_i32_0 : i32, i32
  }
  func.func @transform_3(%arg0: i32) -> (i32, i32, i32) {
    %c0_i32 = arith.constant 0 : i32
    %c0_i32_0 = arith.constant 0 : i32
    %c0_i32_1 = arith.constant 0 : i32
    %c0_i32_2 = arith.constant 0 : i32
    return %c0_i32, %c0_i32_0, %c0_i32_1 : i32, i32, i32
  }
  func.func @transform_4(%arg0: i32) -> (i32, i32) {
    %c0_i32 = arith.constant 0 : i32
    %c0_i32_0 = arith.constant 0 : i32
    %c0_i32_1 = arith.constant 0 : i32
    return %c0_i32, %c0_i32_0 : i32, i32
  }
  func.func @transform_5(%arg0: i32) -> (i32, i32, i32) {
    %c0_i32 = arith.constant 0 : i32
    %c0_i32_0 = arith.constant 0 : i32
    %c0_i32_1 = arith.constant 0 : i32
    return %arg0, %c0_i32, %c0_i32_0 : i32, i32, i32
  }
}

module attributes {stable_mosaic.version = 11 : i64} {
  func.func @kernel(%arg0: i32, %arg1: memref<1x4x256xf32, #tpu.memory_space<vmem>>, %arg2: memref<2x4xf32, #tpu.memory_space<vmem>>, %arg3: memref<2x1xf32, #tpu.memory_space<vmem>>, %arg4: memref<4x8x2xf32, #tpu.memory_space<vmem>>, %arg5: memref<8x1xf32, #tpu.memory_space<vmem>>, %arg6: memref<1x8x256xf32, #tpu.memory_space<vmem>>) attributes {dimension_semantics = [#tpu.dimension_semantics<parallel>], iteration_bounds = array<i64: 2>, scalar_prefetch = 0 : i64, scratch_operands = 0 : i64, tpu.core_type = #tpu.core_type<tc>, window_params = [{transform_indices = @transform_0, window_bounds = array<i64: 1, 4, 256>}, {pipeline_mode = #tpu.pipeline_mode<synchronous>, transform_indices = @transform_1, window_bounds = array<i64: 2, 4>}, {pipeline_mode = #tpu.pipeline_mode<synchronous>, transform_indices = @transform_2, window_bounds = array<i64: 2, 1>}, {pipeline_mode = #tpu.pipeline_mode<synchronous>, transform_indices = @transform_3, window_bounds = array<i64: 4, 8, 2>}, {pipeline_mode = #tpu.pipeline_mode<synchronous>, transform_indices = @transform_4, window_bounds = array<i64: 8, 1>}, {transform_indices = @transform_5, window_bounds = array<i64: 1, 8, 256>}]} {
    %0 = tpu.iota {dimensions = array<i32: 1>} : vector<1x256xi32>
    %c16_i32 = arith.constant 16 : i32
    %c0_i32 = arith.constant 0 : i32
    %1 = arith.cmpi eq, %c16_i32, %c0_i32 : i32
    %c1_i32 = arith.constant 1 : i32
    %2 = arith.select %1, %c1_i32, %c16_i32 : i32
    %3 = vector.broadcast %2 : i32 to vector<1x256xi32>
    %4 = arith.remsi %0, %3 : vector<1x256xi32>
    %c0_i32_0 = arith.constant 0 : i32
    %5 = vector.broadcast %c0_i32_0 : i32 to vector<1x256xi32>
    %6 = arith.cmpi ne, %4, %5 : vector<1x256xi32>
    %c0_i32_1 = arith.constant 0 : i32
    %7 = vector.broadcast %c0_i32_1 : i32 to vector<1x256xi32>
    %8 = arith.cmpi slt, %4, %7 : vector<1x256xi32>
    %c0_i32_2 = arith.constant 0 : i32
    %9 = arith.cmpi slt, %2, %c0_i32_2 : i32
    %10 = vector.broadcast %9 : i1 to vector<1x256xi1>
    %11 = vector.broadcast %10 : vector<1x256xi1> to vector<1x256xi1>
    %12 = arith.xori %8, %11 : vector<1x256xi1>
    %13 = arith.andi %12, %6 : vector<1x256xi1>
    %14 = vector.broadcast %2 : i32 to vector<1x256xi32>
    %15 = arith.addi %4, %14 : vector<1x256xi32>
    %16 = arith.select %13, %15, %4 : vector<1x256xi1>, vector<1x256xi32>
    %c-2_i32 = arith.constant -2 : i32
    %17 = vector.broadcast %c-2_i32 : i32 to vector<1x256xi32>
    %18 = arith.addi %16, %17 : vector<1x256xi32>
    %c0_i32_3 = arith.constant 0 : i32
    %19 = vector.broadcast %c0_i32_3 : i32 to vector<1x256xi32>
    %20 = arith.cmpi sge, %18, %19 : vector<1x256xi32>
    %c-2_i32_4 = arith.constant -2 : i32
    %21 = vector.broadcast %c-2_i32_4 : i32 to vector<1x256xi32>
    %22 = arith.addi %16, %21 : vector<1x256xi32>
    %c16_i32_5 = arith.constant 16 : i32
    %23 = vector.broadcast %c16_i32_5 : i32 to vector<1x256xi32>
    %24 = arith.cmpi slt, %22, %23 : vector<1x256xi32>
    %25 = arith.andi %20, %24 : vector<1x256xi1>
    %cst = arith.constant 0.000000e+00 : f32
    %cst_6 = arith.constant 0xFF800000 : f32
    %26 = vector.broadcast %cst : f32 to vector<1x256xf32>
    %27 = vector.broadcast %cst_6 : f32 to vector<1x256xf32>
    %28 = arith.select %25, %26, %27 : vector<1x256xi1>, vector<1x256xf32>
    %c-1_i32 = arith.constant -1 : i32
    %29 = vector.broadcast %c-1_i32 : i32 to vector<1x256xi32>
    %30 = arith.addi %16, %29 : vector<1x256xi32>
    %c0_i32_7 = arith.constant 0 : i32
    %31 = vector.broadcast %c0_i32_7 : i32 to vector<1x256xi32>
    %32 = arith.cmpi sge, %30, %31 : vector<1x256xi32>
    %c-1_i32_8 = arith.constant -1 : i32
    %33 = vector.broadcast %c-1_i32_8 : i32 to vector<1x256xi32>
    %34 = arith.addi %16, %33 : vector<1x256xi32>
    %c16_i32_9 = arith.constant 16 : i32
    %35 = vector.broadcast %c16_i32_9 : i32 to vector<1x256xi32>
    %36 = arith.cmpi slt, %34, %35 : vector<1x256xi32>
    %37 = arith.andi %32, %36 : vector<1x256xi1>
    %cst_10 = arith.constant 0.000000e+00 : f32
    %cst_11 = arith.constant 0xFF800000 : f32
    %38 = vector.broadcast %cst_10 : f32 to vector<1x256xf32>
    %39 = vector.broadcast %cst_11 : f32 to vector<1x256xf32>
    %40 = arith.select %37, %38, %39 : vector<1x256xi1>, vector<1x256xf32>
    %c1_i32_12 = arith.constant 1 : i32
    %41 = vector.broadcast %c1_i32_12 : i32 to vector<1x256xi32>
    %42 = arith.addi %16, %41 : vector<1x256xi32>
    %c0_i32_13 = arith.constant 0 : i32
    %43 = vector.broadcast %c0_i32_13 : i32 to vector<1x256xi32>
    %44 = arith.cmpi sge, %42, %43 : vector<1x256xi32>
    %c1_i32_14 = arith.constant 1 : i32
    %45 = vector.broadcast %c1_i32_14 : i32 to vector<1x256xi32>
    %46 = arith.addi %16, %45 : vector<1x256xi32>
    %c16_i32_15 = arith.constant 16 : i32
    %47 = vector.broadcast %c16_i32_15 : i32 to vector<1x256xi32>
    %48 = arith.cmpi slt, %46, %47 : vector<1x256xi32>
    %49 = arith.andi %44, %48 : vector<1x256xi1>
    %cst_16 = arith.constant 0.000000e+00 : f32
    %cst_17 = arith.constant 0xFF800000 : f32
    %50 = vector.broadcast %cst_16 : f32 to vector<1x256xf32>
    %51 = vector.broadcast %cst_17 : f32 to vector<1x256xf32>
    %52 = arith.select %49, %50, %51 : vector<1x256xi1>, vector<1x256xf32>
    %c2_i32 = arith.constant 2 : i32
    %53 = vector.broadcast %c2_i32 : i32 to vector<1x256xi32>
    %54 = arith.addi %16, %53 : vector<1x256xi32>
    %c0_i32_18 = arith.constant 0 : i32
    %55 = vector.broadcast %c0_i32_18 : i32 to vector<1x256xi32>
    %56 = arith.cmpi sge, %54, %55 : vector<1x256xi32>
    %c2_i32_19 = arith.constant 2 : i32
    %57 = vector.broadcast %c2_i32_19 : i32 to vector<1x256xi32>
    %58 = arith.addi %16, %57 : vector<1x256xi32>
    %c16_i32_20 = arith.constant 16 : i32
    %59 = vector.broadcast %c16_i32_20 : i32 to vector<1x256xi32>
    %60 = arith.cmpi slt, %58, %59 : vector<1x256xi32>
    %61 = arith.andi %56, %60 : vector<1x256xi1>
    %cst_21 = arith.constant 0.000000e+00 : f32
    %cst_22 = arith.constant 0xFF800000 : f32
    %62 = vector.broadcast %cst_21 : f32 to vector<1x256xf32>
    %63 = vector.broadcast %cst_22 : f32 to vector<1x256xf32>
    %64 = arith.select %61, %62, %63 : vector<1x256xi1>, vector<1x256xf32>
    %c-32_i32 = arith.constant -32 : i32
    %65 = vector.broadcast %c-32_i32 : i32 to vector<1x256xi32>
    %66 = arith.addi %0, %65 : vector<1x256xi32>
    %c0_i32_23 = arith.constant 0 : i32
    %67 = vector.broadcast %c0_i32_23 : i32 to vector<1x256xi32>
    %68 = arith.cmpi sge, %66, %67 : vector<1x256xi32>
    %c-32_i32_24 = arith.constant -32 : i32
    %69 = vector.broadcast %c-32_i32_24 : i32 to vector<1x256xi32>
    %70 = arith.addi %0, %69 : vector<1x256xi32>
    %c256_i32 = arith.constant 256 : i32
    %71 = vector.broadcast %c256_i32 : i32 to vector<1x256xi32>
    %72 = arith.cmpi slt, %70, %71 : vector<1x256xi32>
    %73 = arith.andi %68, %72 : vector<1x256xi1>
    %cst_25 = arith.constant 0.000000e+00 : f32
    %cst_26 = arith.constant 0xFF800000 : f32
    %74 = vector.broadcast %cst_25 : f32 to vector<1x256xf32>
    %75 = vector.broadcast %cst_26 : f32 to vector<1x256xf32>
    %76 = arith.select %73, %74, %75 : vector<1x256xi1>, vector<1x256xf32>
    %c-16_i32 = arith.constant -16 : i32
    %77 = vector.broadcast %c-16_i32 : i32 to vector<1x256xi32>
    %78 = arith.addi %0, %77 : vector<1x256xi32>
    %c0_i32_27 = arith.constant 0 : i32
    %79 = vector.broadcast %c0_i32_27 : i32 to vector<1x256xi32>
    %80 = arith.cmpi sge, %78, %79 : vector<1x256xi32>
    %c-16_i32_28 = arith.constant -16 : i32
    %81 = vector.broadcast %c-16_i32_28 : i32 to vector<1x256xi32>
    %82 = arith.addi %0, %81 : vector<1x256xi32>
    %c256_i32_29 = arith.constant 256 : i32
    %83 = vector.broadcast %c256_i32_29 : i32 to vector<1x256xi32>
    %84 = arith.cmpi slt, %82, %83 : vector<1x256xi32>
    %85 = arith.andi %80, %84 : vector<1x256xi1>
    %cst_30 = arith.constant 0.000000e+00 : f32
    %cst_31 = arith.constant 0xFF800000 : f32
    %86 = vector.broadcast %cst_30 : f32 to vector<1x256xf32>
    %87 = vector.broadcast %cst_31 : f32 to vector<1x256xf32>
    %88 = arith.select %85, %86, %87 : vector<1x256xi1>, vector<1x256xf32>
    %c16_i32_32 = arith.constant 16 : i32
    %89 = vector.broadcast %c16_i32_32 : i32 to vector<1x256xi32>
    %90 = arith.addi %0, %89 : vector<1x256xi32>
    %c0_i32_33 = arith.constant 0 : i32
    %91 = vector.broadcast %c0_i32_33 : i32 to vector<1x256xi32>
    %92 = arith.cmpi sge, %90, %91 : vector<1x256xi32>
    %c16_i32_34 = arith.constant 16 : i32
    %93 = vector.broadcast %c16_i32_34 : i32 to vector<1x256xi32>
    %94 = arith.addi %0, %93 : vector<1x256xi32>
    %c256_i32_35 = arith.constant 256 : i32
    %95 = vector.broadcast %c256_i32_35 : i32 to vector<1x256xi32>
    %96 = arith.cmpi slt, %94, %95 : vector<1x256xi32>
    %97 = arith.andi %92, %96 : vector<1x256xi1>
    %cst_36 = arith.constant 0.000000e+00 : f32
    %cst_37 = arith.constant 0xFF800000 : f32
    %98 = vector.broadcast %cst_36 : f32 to vector<1x256xf32>
    %99 = vector.broadcast %cst_37 : f32 to vector<1x256xf32>
    %100 = arith.select %97, %98, %99 : vector<1x256xi1>, vector<1x256xf32>
    %c32_i32 = arith.constant 32 : i32
    %101 = vector.broadcast %c32_i32 : i32 to vector<1x256xi32>
    %102 = arith.addi %0, %101 : vector<1x256xi32>
    %c0_i32_38 = arith.constant 0 : i32
    %103 = vector.broadcast %c0_i32_38 : i32 to vector<1x256xi32>
    %104 = arith.cmpi sge, %102, %103 : vector<1x256xi32>
    %c32_i32_39 = arith.constant 32 : i32
    %105 = vector.broadcast %c32_i32_39 : i32 to vector<1x256xi32>
    %106 = arith.addi %0, %105 : vector<1x256xi32>
    %c256_i32_40 = arith.constant 256 : i32
    %107 = vector.broadcast %c256_i32_40 : i32 to vector<1x256xi32>
    %108 = arith.cmpi slt, %106, %107 : vector<1x256xi32>
    %109 = arith.andi %104, %108 : vector<1x256xi1>
    %cst_41 = arith.constant 0.000000e+00 : f32
    %cst_42 = arith.constant 0xFF800000 : f32
    %110 = vector.broadcast %cst_41 : f32 to vector<1x256xf32>
    %111 = vector.broadcast %cst_42 : f32 to vector<1x256xf32>
    %112 = arith.select %109, %110, %111 : vector<1x256xi1>, vector<1x256xf32>
    %113 = vector.shape_cast %28 : vector<1x256xf32> to vector<1x256xf32>
    %114 = vector.broadcast %113 : vector<1x256xf32> to vector<2x256xf32>
    %115 = vector.shape_cast %40 : vector<1x256xf32> to vector<1x256xf32>
    %116 = vector.broadcast %115 : vector<1x256xf32> to vector<2x256xf32>
    %117 = vector.shape_cast %52 : vector<1x256xf32> to vector<1x256xf32>
    %118 = vector.broadcast %117 : vector<1x256xf32> to vector<2x256xf32>
    %119 = vector.shape_cast %64 : vector<1x256xf32> to vector<1x256xf32>
    %120 = vector.broadcast %119 : vector<1x256xf32> to vector<2x256xf32>
    %121 = vector.shape_cast %76 : vector<1x256xf32> to vector<1x256xf32>
    %122 = vector.broadcast %121 : vector<1x256xf32> to vector<2x256xf32>
    %123 = vector.shape_cast %88 : vector<1x256xf32> to vector<1x256xf32>
    %124 = vector.broadcast %123 : vector<1x256xf32> to vector<2x256xf32>
    %125 = vector.shape_cast %100 : vector<1x256xf32> to vector<1x256xf32>
    %126 = vector.broadcast %125 : vector<1x256xf32> to vector<2x256xf32>
    %127 = vector.shape_cast %112 : vector<1x256xf32> to vector<1x256xf32>
    %128 = vector.broadcast %127 : vector<1x256xf32> to vector<2x256xf32>
    %c0 = arith.constant 0 : index
    %c0_43 = arith.constant 0 : index
    %129 = vector.load %arg2[%c0, %c0_43] : memref<2x4xf32, #tpu.memory_space<vmem>>, vector<2x4xf32>
    %c0_44 = arith.constant 0 : index
    %c0_45 = arith.constant 0 : index
    %c0_46 = arith.constant 0 : index
    %130 = vector.load %arg1[%c0_44, %c0_45, %c0_46] : memref<1x4x256xf32, #tpu.memory_space<vmem>>, vector<1x4x256xf32>
    %131 = vector.shape_cast %130 : vector<1x4x256xf32> to vector<4x256xf32>
    %cst_47 = arith.constant dense<0.000000e+00> : vector<2x256xf32>
    %132 = tpu.matmul %129, %131, %cst_47 {dimension_numbers = #tpu.dot_dimension_numbers<[1], [0], [0], [1], [0, 0, 1, 1], [], []>} : vector<2x4xf32>, vector<4x256xf32>, vector<2x256xf32> -> vector<2x256xf32>
    %c0_48 = arith.constant 0 : index
    %c0_49 = arith.constant 0 : index
    %133 = vector.load %arg3[%c0_48, %c0_49] : memref<2x1xf32, #tpu.memory_space<vmem>>, vector<2x1xf32>
    %134 = vector.broadcast %133 : vector<2x1xf32> to vector<2x256xf32>
    %135 = arith.addf %132, %134 : vector<2x256xf32>
    %136 = arith.negf %135 : vector<2x256xf32>
    %137 = math.exp %136 : vector<2x256xf32>
    %cst_50 = arith.constant 1.000000e+00 : f32
    %138 = vector.broadcast %cst_50 : f32 to vector<2x256xf32>
    %139 = arith.addf %138, %137 : vector<2x256xf32>
    %140 = arith.divf %138, %139 : vector<2x256xf32>
    %141 = arith.mulf %135, %140 : vector<2x256xf32>
    %c0_51 = arith.constant 0 : index
    %c0_52 = arith.constant 0 : index
    %c0_53 = arith.constant 0 : index
    %142 = vector.load %arg4[%c0_51, %c0_52, %c0_53] : memref<4x8x2xf32, #tpu.memory_space<vmem>>, vector<4x8x2xf32>
    %143 = vector.extract_strided_slice %142 {offsets = [0, 0, 0], sizes = [1, 8, 2], strides = [1, 1, 1]} : vector<4x8x2xf32> to vector<1x8x2xf32>
    %144 = vector.shape_cast %143 : vector<1x8x2xf32> to vector<8x2xf32>
    %cst_54 = arith.constant dense<0.000000e+00> : vector<8x256xf32>
    %145 = tpu.matmul %144, %141, %cst_54 {dimension_numbers = #tpu.dot_dimension_numbers<[1], [0], [0], [1], [0, 0, 1, 1], [], []>} : vector<8x2xf32>, vector<2x256xf32>, vector<8x256xf32> -> vector<8x256xf32>
    %c2_i32_55 = arith.constant 2 : i32
    %146 = tpu.dynamic_rotate %141 by %c2_i32_55 dim 1 : vector<2x256xf32>, i32 -> vector<2x256xf32>
    %147 = arith.addf %146, %114 : vector<2x256xf32>
    %148 = arith.maximumf %141, %147 : vector<2x256xf32>
    %c1_i32_56 = arith.constant 1 : i32
    %149 = tpu.dynamic_rotate %141 by %c1_i32_56 dim 1 : vector<2x256xf32>, i32 -> vector<2x256xf32>
    %150 = arith.addf %149, %116 : vector<2x256xf32>
    %151 = arith.maximumf %148, %150 : vector<2x256xf32>
    %c255_i32 = arith.constant 255 : i32
    %152 = tpu.dynamic_rotate %141 by %c255_i32 dim 1 : vector<2x256xf32>, i32 -> vector<2x256xf32>
    %153 = arith.addf %152, %118 : vector<2x256xf32>
    %154 = arith.maximumf %151, %153 : vector<2x256xf32>
    %c254_i32 = arith.constant 254 : i32
    %155 = tpu.dynamic_rotate %141 by %c254_i32 dim 1 : vector<2x256xf32>, i32 -> vector<2x256xf32>
    %156 = arith.addf %155, %120 : vector<2x256xf32>
    %157 = arith.maximumf %154, %156 : vector<2x256xf32>
    %c32_i32_57 = arith.constant 32 : i32
    %158 = tpu.dynamic_rotate %157 by %c32_i32_57 dim 1 : vector<2x256xf32>, i32 -> vector<2x256xf32>
    %159 = arith.addf %158, %122 : vector<2x256xf32>
    %160 = arith.maximumf %157, %159 : vector<2x256xf32>
    %c16_i32_58 = arith.constant 16 : i32
    %161 = tpu.dynamic_rotate %157 by %c16_i32_58 dim 1 : vector<2x256xf32>, i32 -> vector<2x256xf32>
    %162 = arith.addf %161, %124 : vector<2x256xf32>
    %163 = arith.maximumf %160, %162 : vector<2x256xf32>
    %c240_i32 = arith.constant 240 : i32
    %164 = tpu.dynamic_rotate %157 by %c240_i32 dim 1 : vector<2x256xf32>, i32 -> vector<2x256xf32>
    %165 = arith.addf %164, %126 : vector<2x256xf32>
    %166 = arith.maximumf %163, %165 : vector<2x256xf32>
    %c224_i32 = arith.constant 224 : i32
    %167 = tpu.dynamic_rotate %157 by %c224_i32 dim 1 : vector<2x256xf32>, i32 -> vector<2x256xf32>
    %168 = arith.addf %167, %128 : vector<2x256xf32>
    %169 = arith.maximumf %166, %168 : vector<2x256xf32>
    %170 = vector.extract_strided_slice %142 {offsets = [1, 0, 0], sizes = [1, 8, 2], strides = [1, 1, 1]} : vector<4x8x2xf32> to vector<1x8x2xf32>
    %171 = vector.shape_cast %170 : vector<1x8x2xf32> to vector<8x2xf32>
    %cst_59 = arith.constant dense<0.000000e+00> : vector<8x256xf32>
    %172 = tpu.matmul %171, %169, %cst_59 {dimension_numbers = #tpu.dot_dimension_numbers<[1], [0], [0], [1], [0, 0, 1, 1], [], []>} : vector<8x2xf32>, vector<2x256xf32>, vector<8x256xf32> -> vector<8x256xf32>
    %173 = arith.addf %145, %172 : vector<8x256xf32>
    %c2_i32_60 = arith.constant 2 : i32
    %174 = tpu.dynamic_rotate %169 by %c2_i32_60 dim 1 : vector<2x256xf32>, i32 -> vector<2x256xf32>
    %175 = arith.addf %174, %114 : vector<2x256xf32>
    %176 = arith.maximumf %169, %175 : vector<2x256xf32>
    %c1_i32_61 = arith.constant 1 : i32
    %177 = tpu.dynamic_rotate %169 by %c1_i32_61 dim 1 : vector<2x256xf32>, i32 -> vector<2x256xf32>
    %178 = arith.addf %177, %116 : vector<2x256xf32>
    %179 = arith.maximumf %176, %178 : vector<2x256xf32>
    %c255_i32_62 = arith.constant 255 : i32
    %180 = tpu.dynamic_rotate %169 by %c255_i32_62 dim 1 : vector<2x256xf32>, i32 -> vector<2x256xf32>
    %181 = arith.addf %180, %118 : vector<2x256xf32>
    %182 = arith.maximumf %179, %181 : vector<2x256xf32>
    %c254_i32_63 = arith.constant 254 : i32
    %183 = tpu.dynamic_rotate %169 by %c254_i32_63 dim 1 : vector<2x256xf32>, i32 -> vector<2x256xf32>
    %184 = arith.addf %183, %120 : vector<2x256xf32>
    %185 = arith.maximumf %182, %184 : vector<2x256xf32>
    %c32_i32_64 = arith.constant 32 : i32
    %186 = tpu.dynamic_rotate %185 by %c32_i32_64 dim 1 : vector<2x256xf32>, i32 -> vector<2x256xf32>
    %187 = arith.addf %186, %122 : vector<2x256xf32>
    %188 = arith.maximumf %185, %187 : vector<2x256xf32>
    %c16_i32_65 = arith.constant 16 : i32
    %189 = tpu.dynamic_rotate %185 by %c16_i32_65 dim 1 : vector<2x256xf32>, i32 -> vector<2x256xf32>
    %190 = arith.addf %189, %124 : vector<2x256xf32>
    %191 = arith.maximumf %188, %190 : vector<2x256xf32>
    %c240_i32_66 = arith.constant 240 : i32
    %192 = tpu.dynamic_rotate %185 by %c240_i32_66 dim 1 : vector<2x256xf32>, i32 -> vector<2x256xf32>
    %193 = arith.addf %192, %126 : vector<2x256xf32>
    %194 = arith.maximumf %191, %193 : vector<2x256xf32>
    %c224_i32_67 = arith.constant 224 : i32
    %195 = tpu.dynamic_rotate %185 by %c224_i32_67 dim 1 : vector<2x256xf32>, i32 -> vector<2x256xf32>
    %196 = arith.addf %195, %128 : vector<2x256xf32>
    %197 = arith.maximumf %194, %196 : vector<2x256xf32>
    %198 = vector.extract_strided_slice %142 {offsets = [2, 0, 0], sizes = [1, 8, 2], strides = [1, 1, 1]} : vector<4x8x2xf32> to vector<1x8x2xf32>
    %199 = vector.shape_cast %198 : vector<1x8x2xf32> to vector<8x2xf32>
    %cst_68 = arith.constant dense<0.000000e+00> : vector<8x256xf32>
    %200 = tpu.matmul %199, %197, %cst_68 {dimension_numbers = #tpu.dot_dimension_numbers<[1], [0], [0], [1], [0, 0, 1, 1], [], []>} : vector<8x2xf32>, vector<2x256xf32>, vector<8x256xf32> -> vector<8x256xf32>
    %201 = arith.addf %173, %200 : vector<8x256xf32>
    %c2_i32_69 = arith.constant 2 : i32
    %202 = tpu.dynamic_rotate %197 by %c2_i32_69 dim 1 : vector<2x256xf32>, i32 -> vector<2x256xf32>
    %203 = arith.addf %202, %114 : vector<2x256xf32>
    %204 = arith.maximumf %197, %203 : vector<2x256xf32>
    %c1_i32_70 = arith.constant 1 : i32
    %205 = tpu.dynamic_rotate %197 by %c1_i32_70 dim 1 : vector<2x256xf32>, i32 -> vector<2x256xf32>
    %206 = arith.addf %205, %116 : vector<2x256xf32>
    %207 = arith.maximumf %204, %206 : vector<2x256xf32>
    %c255_i32_71 = arith.constant 255 : i32
    %208 = tpu.dynamic_rotate %197 by %c255_i32_71 dim 1 : vector<2x256xf32>, i32 -> vector<2x256xf32>
    %209 = arith.addf %208, %118 : vector<2x256xf32>
    %210 = arith.maximumf %207, %209 : vector<2x256xf32>
    %c254_i32_72 = arith.constant 254 : i32
    %211 = tpu.dynamic_rotate %197 by %c254_i32_72 dim 1 : vector<2x256xf32>, i32 -> vector<2x256xf32>
    %212 = arith.addf %211, %120 : vector<2x256xf32>
    %213 = arith.maximumf %210, %212 : vector<2x256xf32>
    %c32_i32_73 = arith.constant 32 : i32
    %214 = tpu.dynamic_rotate %213 by %c32_i32_73 dim 1 : vector<2x256xf32>, i32 -> vector<2x256xf32>
    %215 = arith.addf %214, %122 : vector<2x256xf32>
    %216 = arith.maximumf %213, %215 : vector<2x256xf32>
    %c16_i32_74 = arith.constant 16 : i32
    %217 = tpu.dynamic_rotate %213 by %c16_i32_74 dim 1 : vector<2x256xf32>, i32 -> vector<2x256xf32>
    %218 = arith.addf %217, %124 : vector<2x256xf32>
    %219 = arith.maximumf %216, %218 : vector<2x256xf32>
    %c240_i32_75 = arith.constant 240 : i32
    %220 = tpu.dynamic_rotate %213 by %c240_i32_75 dim 1 : vector<2x256xf32>, i32 -> vector<2x256xf32>
    %221 = arith.addf %220, %126 : vector<2x256xf32>
    %222 = arith.maximumf %219, %221 : vector<2x256xf32>
    %c224_i32_76 = arith.constant 224 : i32
    %223 = tpu.dynamic_rotate %213 by %c224_i32_76 dim 1 : vector<2x256xf32>, i32 -> vector<2x256xf32>
    %224 = arith.addf %223, %128 : vector<2x256xf32>
    %225 = arith.maximumf %222, %224 : vector<2x256xf32>
    %226 = vector.extract_strided_slice %142 {offsets = [3, 0, 0], sizes = [1, 8, 2], strides = [1, 1, 1]} : vector<4x8x2xf32> to vector<1x8x2xf32>
    %227 = vector.shape_cast %226 : vector<1x8x2xf32> to vector<8x2xf32>
    %cst_77 = arith.constant dense<0.000000e+00> : vector<8x256xf32>
    %228 = tpu.matmul %227, %225, %cst_77 {dimension_numbers = #tpu.dot_dimension_numbers<[1], [0], [0], [1], [0, 0, 1, 1], [], []>} : vector<8x2xf32>, vector<2x256xf32>, vector<8x256xf32> -> vector<8x256xf32>
    %229 = arith.addf %201, %228 : vector<8x256xf32>
    %c0_78 = arith.constant 0 : index
    %c0_79 = arith.constant 0 : index
    %230 = vector.load %arg5[%c0_78, %c0_79] : memref<8x1xf32, #tpu.memory_space<vmem>>, vector<8x1xf32>
    %231 = vector.broadcast %230 : vector<8x1xf32> to vector<8x256xf32>
    %232 = arith.addf %229, %231 : vector<8x256xf32>
    %233 = arith.negf %232 : vector<8x256xf32>
    %234 = math.exp %233 : vector<8x256xf32>
    %cst_80 = arith.constant 1.000000e+00 : f32
    %235 = vector.broadcast %cst_80 : f32 to vector<8x256xf32>
    %236 = arith.addf %235, %234 : vector<8x256xf32>
    %237 = arith.divf %235, %236 : vector<8x256xf32>
    %238 = arith.mulf %232, %237 : vector<8x256xf32>
    %c0_81 = arith.constant 0 : index
    %c0_82 = arith.constant 0 : index
    %c0_83 = arith.constant 0 : index
    %239 = vector.load %arg6[%c0_81, %c0_82, %c0_83] : memref<1x8x256xf32, #tpu.memory_space<vmem>>, vector<1x8x256xf32>
    %240 = vector.shape_cast %239 : vector<1x8x256xf32> to vector<8x256xf32>
    %241 = vector.shape_cast %238 : vector<8x256xf32> to vector<1x8x256xf32>
    tpu.vector_store %arg6[%c0_81, %c0_82, %c0_83], %241 {strides = array<i32>} : memref<1x8x256xf32, #tpu.memory_space<vmem>>, vector<1x8x256xf32>,
    return
  }
  func.func @transform_0(%arg0: i32) -> (i32, i32, i32) {
    %c0_i32 = arith.constant 0 : i32
    %c0_i32_0 = arith.constant 0 : i32
    %c0_i32_1 = arith.constant 0 : i32
    return %arg0, %c0_i32, %c0_i32_0 : i32, i32, i32
  }
  func.func @transform_1(%arg0: i32) -> (i32, i32) {
    %c0_i32 = arith.constant 0 : i32
    %c0_i32_0 = arith.constant 0 : i32
    %c0_i32_1 = arith.constant 0 : i32
    return %c0_i32, %c0_i32_0 : i32, i32
  }
  func.func @transform_2(%arg0: i32) -> (i32, i32) {
    %c0_i32 = arith.constant 0 : i32
    %c0_i32_0 = arith.constant 0 : i32
    %c0_i32_1 = arith.constant 0 : i32
    return %c0_i32, %c0_i32_0 : i32, i32
  }
  func.func @transform_3(%arg0: i32) -> (i32, i32, i32) {
    %c0_i32 = arith.constant 0 : i32
    %c0_i32_0 = arith.constant 0 : i32
    %c0_i32_1 = arith.constant 0 : i32
    %c0_i32_2 = arith.constant 0 : i32
    return %c0_i32, %c0_i32_0, %c0_i32_1 : i32, i32, i32
  }
  func.func @transform_4(%arg0: i32) -> (i32, i32) {
    %c0_i32 = arith.constant 0 : i32
    %c0_i32_0 = arith.constant 0 : i32
    %c0_i32_1 = arith.constant 0 : i32
    return %c0_i32, %c0_i32_0 : i32, i32
  }
  func.func @transform_5(%arg0: i32) -> (i32, i32, i32) {
    %c0_i32 = arith.constant 0 : i32
    %c0_i32_0 = arith.constant 0 : i32
    %c0_i32_1 = arith.constant 0 : i32
    return %arg0, %c0_i32, %c0_i32_0 : i32, i32, i32
  }
}

</mosaic_0001>

<llo_original>
// kernel: tpu_custom_call.1
$region0: #{tpu_custom_call.1}
  #allocation0 [shape = 'u32[]', space=smem, size = 0x4, offset = 0x4, fixed_abs, tag = 'smem constant byte address 0x4 - core index']
  #allocation1 [shape = 'u32[144,128]{1,0:T(1,128)}', space=vmem, size = 0x12000, scoped, tag = 'internal scratch']
  %s0 = inlined_call_operand.vmem [shape: f32[2,4,256], index: 0, kind: input, shape index: {}]
  %s1 = inlined_call_operand.vmem [shape: f32[2,4], index: 1, kind: input, shape index: {}]
  %s2 = inlined_call_operand.vmem [shape: f32[2,1], index: 2, kind: input, shape index: {}]
  %s3 = inlined_call_operand.vmem [shape: f32[4,8,2], index: 3, kind: input, shape index: {}]
  %s4 = inlined_call_operand.vmem [shape: f32[8,1], index: 4, kind: input, shape index: {}]
  %s5 = inlined_call_operand.hbm [shape: f32[2,8,256], index: 5, kind: output, shape index: {}]
  %s6 = sld [smem:[#allocation0]]
  $region53: #{tpu_custom_call.1} parent=0
    _
  %s8 = ssub.s32 1, %s6
  %s9 = scalar_select 0, %s8, %s6
  $region1: #{tpu_custom_call.1} parent=0
    #allocation2 [shape = 'u8[16384]{0}', space=vmem, size = 0x4000, scoped, tag = 'output window, operand 0']
    #allocation3 [shape = 's32[2]{0}', space=sflag, size = 0x8, scoped, tag = 'scoped memory for tpu_custom_call.1']
    %10 = vsyncpa [#allocation3], 0
    %s11 = scalar_lea.sflag [#allocation3], 1
    %12 = vsyncpa %s11, 0
    loop: start=0, step=1, limit=4
    $region2: #{tpu_custom_call.1} parent=1 // loop_pre_header
      _
    $region3: #{tpu_custom_call.1} parent=1 // loop_header
      %s14 = sphi 0, %s18
      %p15 = scmp.ge.s32.totalorder %s14, 4
      %s24 = sphi 0, %s26
      %s27 = sphi 0, %s24
      %s28 = sphi 0, %s27
      %s44 = sphi 0, %s28
      %s48 = sphi 0, %s48
      %s50 = sphi 0, %s48
      %s51 = sphi 0, %s50
      %s65 = sphi 0, %s51
      %s69 = sphi 0, %s69
      %s71 = sphi 0, %s69
      %s72 = sphi 0, %s71
      %s86 = sphi 0, %s72
      %s90 = sphi 0, %s90
      %s92 = sphi 0, %s90
      %s93 = sphi 0, %s92
      %s107 = sphi 0, %s93
      %s111 = sphi 0, %s111
      %s113 = sphi 0, %s111
      %s114 = sphi 0, %s113
      %s128 = sphi 0, %s114
      %s134 = sphi 0, %s136
      %s137 = sphi 0, %s134
      %s138 = sphi 0, %s137
      %s154 = sphi 0, %s138
    $region4: #{tpu_custom_call.1} parent=1 // loop_header_branch
      %17 = sbr.rel (%p15) target = $region8
    $region5: #{tpu_custom_call.1} parent=1 // loop_body
      %s19 = ssub.s32 %s14, 1
      %s20 = ssub.s32 %s14, 2
      %s21 = sadd.s32 %s14, 1
      %s22 = ssub.s32 %s14, %s21
      %p23 = scmp.eq.s32.totalorder %s22, 0
      %s25 = sadd.s32 %s24, 1
      %s26 = scalar_select %p23, %s24, %s25
      %p29 = pneg %p23
      %p30 = scmp.eq.s32.totalorder %s14, 1
      %p31 = por %p29, %p30
      %p32 = scmp.ne.s32.totalorder %s24, %s27
      %p33 = scmp.eq.s32.totalorder %s14, 0
      %p34 = por %p32, %p33
      %p35 = scmp.ne.s32.totalorder %s24, %s27
      %p36 = scmp.eq.s32.totalorder %s19, 1
      %p37 = por %p35, %p36
      %p38 = scmp.ne.s32.totalorder %s27, %s28
      %p39 = scmp.eq.s32.totalorder %s19, 0
      %p40 = por %p38, %p39
      %p41 = scmp.ne.s32.totalorder %s27, %s28
      %p42 = scmp.eq.s32.totalorder %s20, 1
      %p43 = por %p41, %p42
      %p45 = scmp.ne.s32.totalorder %s28, %s44
      %p46 = scmp.eq.s32.totalorder %s20, 0
      %p47 = por %p45, %p46
      %s49 = sadd.s32 %s48, 1
      %p52 = scmp.eq.s32.totalorder %s14, 1
      %p53 = scmp.ne.s32.totalorder %s48, %s50
      %p54 = scmp.eq.s32.totalorder %s14, 0
      %p55 = por %p53, %p54
      %p56 = scmp.ne.s32.totalorder %s48, %s50
      %p57 = scmp.eq.s32.totalorder %s19, 1
      %p58 = por %p56, %p57
      %p59 = scmp.ne.s32.totalorder %s50, %s51
      %p60 = scmp.eq.s32.totalorder %s19, 0
      %p61 = por %p59, %p60
      %p62 = scmp.ne.s32.totalorder %s50, %s51
      %p63 = scmp.eq.s32.totalorder %s20, 1
      %p64 = por %p62, %p63
      %p66 = scmp.ne.s32.totalorder %s51, %s65
      %p67 = scmp.eq.s32.totalorder %s20, 0
      %p68 = por %p66, %p67
      %s70 = sadd.s32 %s69, 1
      %p73 = scmp.eq.s32.totalorder %s14, 1
      %p74 = scmp.ne.s32.totalorder %s69, %s71
      %p75 = scmp.eq.s32.totalorder %s14, 0
      %p76 = por %p74, %p75
      %p77 = scmp.ne.s32.totalorder %s69, %s71
      %p78 = scmp.eq.s32.totalorder %s19, 1
      %p79 = por %p77, %p78
      %p80 = scmp.ne.s32.totalorder %s71, %s72
      %p81 = scmp.eq.s32.totalorder %s19, 0
      %p82 = por %p80, %p81
      %p83 = scmp.ne.s32.totalorder %s71, %s72
      %p84 = scmp.eq.s32.totalorder %s20, 1
      %p85 = por %p83, %p84
      %p87 = scmp.ne.s32.totalorder %s72, %s86
      %p88 = scmp.eq.s32.totalorder %s20, 0
      %p89 = por %p87, %p88
      %s91 = sadd.s32 %s90, 1
      %p94 = scmp.eq.s32.totalorder %s14, 1
      %p95 = scmp.ne.s32.totalorder %s90, %s92
      %p96 = scmp.eq.s32.totalorder %s14, 0
      %p97 = por %p95, %p96
      %p98 = scmp.ne.s32.totalorder %s90, %s92
      %p99 = scmp.eq.s32.totalorder %s19, 1
      %p100 = por %p98, %p99
      %p101 = scmp.ne.s32.totalorder %s92, %s93
      %p102 = scmp.eq.s32.totalorder %s19, 0
      %p103 = por %p101, %p102
      %p104 = scmp.ne.s32.totalorder %s92, %s93
      %p105 = scmp.eq.s32.totalorder %s20, 1
      %p106 = por %p104, %p105
      %p108 = scmp.ne.s32.totalorder %s93, %s107
      %p109 = scmp.eq.s32.totalorder %s20, 0
      %p110 = por %p108, %p109
      %s112 = sadd.s32 %s111, 1
      %p115 = scmp.eq.s32.totalorder %s14, 1
      %p116 = scmp.ne.s32.totalorder %s111, %s113
      %p117 = scmp.eq.s32.totalorder %s14, 0
      %p118 = por %p116, %p117
      %p119 = scmp.ne.s32.totalorder %s111, %s113
      %p120 = scmp.eq.s32.totalorder %s19, 1
      %p121 = por %p119, %p120
      %p122 = scmp.ne.s32.totalorder %s113, %s114
      %p123 = scmp.eq.s32.totalorder %s19, 0
      %p124 = por %p122, %p123
      %p125 = scmp.ne.s32.totalorder %s113, %s114
      %p126 = scmp.eq.s32.totalorder %s20, 1
      %p127 = por %p125, %p126
      %p129 = scmp.ne.s32.totalorder %s114, %s128
      %p130 = scmp.eq.s32.totalorder %s20, 0
      %p131 = por %p129, %p130
      %s132 = ssub.s32 %s14, %s21
      %p133 = scmp.eq.s32.totalorder %s132, 0
      %s135 = sadd.s32 %s134, 1
      %s136 = scalar_select %p133, %s134, %s135
      %p139 = pneg %p133
      %p140 = scmp.eq.s32.totalorder %s14, 1
      %p141 = por %p139, %p140
      %p142 = scmp.ne.s32.totalorder %s134, %s137
      %p143 = scmp.eq.s32.totalorder %s14, 0
      %p144 = por %p142, %p143
      %p145 = scmp.ne.s32.totalorder %s134, %s137
      %p146 = scmp.eq.s32.totalorder %s19, 1
      %p147 = por %p145, %p146
      %p148 = scmp.ne.s32.totalorder %s137, %s138
      %p149 = scmp.eq.s32.totalorder %s19, 0
      %p150 = por %p148, %p149
      %p151 = scmp.ne.s32.totalorder %s137, %s138
      %p152 = scmp.eq.s32.totalorder %s20, 1
      %p153 = por %p151, %p152
      %p155 = scmp.ne.s32.totalorder %s138, %s154
      %p156 = scmp.eq.s32.totalorder %s20, 0
      %p157 = por %p155, %p156
      %p158 = scmp.le.s32.totalorder 1, %s14
      %p159 = scmp.lt.s32.totalorder %s14, 3
      %p160 = pnand %p158, %p159
      %p161 = pneg %p160
      // Predicated region
      $region9: #{tpu_custom_call.1} parent=5 // pred_check
        _
      $region10: #{tpu_custom_call.1} parent=5 // pred_check_branch
        %163 = sbr.rel (%p160) target = $region12
      $region11: #{tpu_custom_call.1} parent=5 // pred_region
        %s164 = ssub.s32 %s14, 1
        // Predicated region
        $region13: #{tpu_custom_call.1} parent=11 // pred_check
          %p165 = pneg %p61
        $region14: #{tpu_custom_call.1} parent=11 // pred_check_branch
          %167 = sbr.rel (%p165) target = $region16
        $region15: #{tpu_custom_call.1} parent=11 // pred_region
          _
        $region16: #{tpu_custom_call.1} parent=11 // pred_fallthru
          _
        // Predicated region
        $region17: #{tpu_custom_call.1} parent=11 // pred_check
          %p168 = pneg %p82
        $region18: #{tpu_custom_call.1} parent=11 // pred_check_branch
          %170 = sbr.rel (%p168) target = $region20
        $region19: #{tpu_custom_call.1} parent=11 // pred_region
          _
        $region20: #{tpu_custom_call.1} parent=11 // pred_fallthru
          _
        // Predicated region
        $region21: #{tpu_custom_call.1} parent=11 // pred_check
          %p171 = pneg %p103
        $region22: #{tpu_custom_call.1} parent=11 // pred_check_branch
          %173 = sbr.rel (%p171) target = $region24
        $region23: #{tpu_custom_call.1} parent=11 // pred_region
          _
        $region24: #{tpu_custom_call.1} parent=11 // pred_fallthru
          _
        // Predicated region
        $region25: #{tpu_custom_call.1} parent=11 // pred_check
          %p174 = pneg %p124
        $region26: #{tpu_custom_call.1} parent=11 // pred_check_branch
          %176 = sbr.rel (%p174) target = $region28
        $region27: #{tpu_custom_call.1} parent=11 // pred_region
          _
        $region28: #{tpu_custom_call.1} parent=11 // pred_fallthru
          _
      $region12: #{tpu_custom_call.1} parent=5 // pred_fallthru
        _
      %p177 = scmp.lt.s32.totalorder %s14, 2
      // Predicated region
      $region29: #{tpu_custom_call.1} parent=5 // pred_check
        %p178 = pneg %p177
      $region30: #{tpu_custom_call.1} parent=5 // pred_check_branch
        %180 = sbr.rel (%p178) target = $region32
      $region31: #{tpu_custom_call.1} parent=5 // pred_region
        // Predicated region
        $region33: #{tpu_custom_call.1} parent=31 // pred_check
          %p181 = pneg %p34
        $region34: #{tpu_custom_call.1} parent=31 // pred_check_branch
          %183 = sbr.rel (%p181) target = $region36
        $region35: #{tpu_custom_call.1} parent=31 // pred_region
          %p184 = scmp.lt.s32.totalorder %s14, 1
          %s185 = scalar_select %p184, %s14, 1
          %s186 = smul.addr %s185, 2
          %s187 = smul.addr %s186, 4
          %s188 = scalar_lea.vmem %s0, %s187
        $region36: #{tpu_custom_call.1} parent=31 // pred_fallthru
          _
      $region32: #{tpu_custom_call.1} parent=5 // pred_fallthru
        _
      %p189 = scmp.le.s32.totalorder 1, %s14
      %p190 = scmp.lt.s32.totalorder %s14, 3
      %p191 = pnand %p189, %p190
      %p192 = pneg %p191
      // Predicated region
      $region37: #{tpu_custom_call.1} parent=5 // pred_check
        _
      $region38: #{tpu_custom_call.1} parent=5 // pred_check_branch
        %194 = sbr.rel (%p191) target = $region40
      $region39: #{tpu_custom_call.1} parent=5 // pred_region
        %s195 = ssub.s32 %s14, 1
        %p196 = scmp.lt.s32.totalorder %s19, 1
        %s197 = scalar_select %p196, %s19, 1
        %s198 = smul.addr %s197, 2
        %s199 = smul.addr %s198, 4
        %s200 = scalar_lea.vmem %s0, %s199
        %p201 = pneg %p40
        %p202 = pneg %p37
        %p203 = pneg %p61
        %p204 = pneg %p58
        %p205 = pneg %p82
        %p206 = pneg %p79
        %p207 = pneg %p103
        %p208 = pneg %p100
        %p209 = pneg %p124
        %p210 = pneg %p121
        %p211 = pneg %p150
        %p212 = pneg %p147
        %s213 = sand.u32 %s137, 1
        %s214 = scalar_lea.sflag [#allocation3], %s213
        %s215 = sand.u32 %s137, 1
        %s216 = smul.addr %s215, 16
        %s217 = scalar_lea.vmem [#allocation2], %s216
        %p218 = scmp.lt.s32.totalorder %s19, 1
        %s219 = scalar_select %p218, %s19, 1
        %s220 = smul.addr %s219, 2
        %s221 = smul.addr %s220, 4
        %s222 = scalar_lea.vmem %s0, %s221
        %v223 = vlaneseq
        %v224 = vand.u32 %v223, 127
        %v225 = vadd.s32 %v224, 128
        %vm226 = vcmp.lt.s32.totalorder %v224, 0
        %v227 = vsub.s32 0, %v224
        %v228 = vsel %vm226, %v227, %v224
        %v229 = vshrl.u32 %v228, 4
        %v230 = vand.u32 %v228, 15
        %v231 = vsub.s32 0, %v230
        %v232 = vsel %vm226, %v231, %v230
        %vm233 = vcmp.lt.s32.totalorder %v225, 0
        %v234 = vsub.s32 0, %v225
        %v235 = vsel %vm233, %v234, %v225
        %v236 = vshrl.u32 %v235, 4
        %v237 = vand.u32 %v235, 15
        %v238 = vsub.s32 0, %v237
        %v239 = vsel %vm233, %v238, %v237
        %vm240 = vcmp.ne.s32.totalorder %v232, 0
        %vm241 = vcmp.ne.s32.totalorder %v239, 0
        %vm242 = vcmp.lt.s32.totalorder %v232, 0
        %vm243 = vcmp.lt.s32.totalorder %v239, 0
        %vm244 = vmand %vm242, %vm240
        %vm245 = vmand %vm243, %vm241
        %v246 = vadd.s32 %v232, 16
        %v247 = vadd.s32 %v239, 16
        %v248 = vsel %vm244, %v246, %v232
        %v249 = vsel %vm245, %v247, %v239
        %v250 = vadd.s32 %v248, 4294967294
        %v251 = vadd.s32 %v249, 4294967294
        %vm252 = vcmp.ge.s32.totalorder %v250, 0
        %vm253 = vcmp.ge.s32.totalorder %v251, 0
        %vm254 = vcmp.lt.s32.totalorder %v250, 16
        %vm255 = vcmp.lt.s32.totalorder %v251, 16
        %vm256 = vmand %vm252, %vm254
        %vm257 = vmand %vm253, %vm255
        %v258 = vsel %vm256, 0.0, -inf
        %v259 = vsel %vm257, 0.0, -inf
        %v260 = vadd.s32 %v248, 4294967295
        %v261 = vadd.s32 %v249, 4294967295
        %vm262 = vcmp.ge.s32.totalorder %v260, 0
        %vm263 = vcmp.ge.s32.totalorder %v261, 0
        %vm264 = vcmp.lt.s32.totalorder %v260, 16
        %vm265 = vcmp.lt.s32.totalorder %v261, 16
        %vm266 = vmand %vm262, %vm264
        %vm267 = vmand %vm263, %vm265
        %v268 = vsel %vm266, 0.0, -inf
        %v269 = vsel %vm267, 0.0, -inf
        %v270 = vadd.s32 %v248, 1
        %v271 = vadd.s32 %v249, 1
        %vm272 = vcmp.ge.s32.totalorder %v270, 0
        %vm273 = vcmp.ge.s32.totalorder %v271, 0
        %vm274 = vcmp.lt.s32.totalorder %v270, 16
        %vm275 = vcmp.lt.s32.totalorder %v271, 16
        %vm276 = vmand %vm272, %vm274
        %vm277 = vmand %vm273, %vm275
        %v278 = vsel %vm276, 0.0, -inf
        %v279 = vsel %vm277, 0.0, -inf
        %v280 = vadd.s32 %v248, 2
        %v281 = vadd.s32 %v249, 2
        %vm282 = vcmp.ge.s32.totalorder %v280, 0
        %vm283 = vcmp.ge.s32.totalorder %v281, 0
        %vm284 = vcmp.lt.s32.totalorder %v280, 16
        %vm285 = vcmp.lt.s32.totalorder %v281, 16
        %vm286 = vmand %vm282, %vm284
        %vm287 = vmand %vm283, %vm285
        %v288 = vsel %vm286, 0.0, -inf
        %v289 = vsel %vm287, 0.0, -inf
        %v290 = vadd.s32 %v224, 4294967264
        %v291 = vadd.s32 %v225, 4294967264
        %vm292 = vcmp.ge.s32.totalorder %v290, 0
        %vm293 = vcmp.ge.s32.totalorder %v291, 0
        %vm294 = vcmp.lt.s32.totalorder %v290, 256
        %vm295 = vcmp.lt.s32.totalorder %v291, 256
        %vm296 = vmand %vm292, %vm294
        %vm297 = vmand %vm293, %vm295
        %v298 = vsel %vm296, 0.0, -inf
        %v299 = vsel %vm297, 0.0, -inf
        %v300 = vadd.s32 %v224, 4294967280
        %v301 = vadd.s32 %v225, 4294967280
        %vm302 = vcmp.ge.s32.totalorder %v300, 0
        %vm303 = vcmp.ge.s32.totalorder %v301, 0
        %vm304 = vcmp.lt.s32.totalorder %v300, 256
        %vm305 = vcmp.lt.s32.totalorder %v301, 256
        %vm306 = vmand %vm302, %vm304
        %vm307 = vmand %vm303, %vm305
        %v308 = vsel %vm306, 0.0, -inf
        %v309 = vsel %vm307, 0.0, -inf
        %v310 = vadd.s32 %v224, 16
        %v311 = vadd.s32 %v225, 16
        %vm312 = vcmp.ge.s32.totalorder %v310, 0
        %vm313 = vcmp.ge.s32.totalorder %v311, 0
        %vm314 = vcmp.lt.s32.totalorder %v310, 256
        %vm315 = vcmp.lt.s32.totalorder %v311, 256
        %vm316 = vmand %vm312, %vm314
        %vm317 = vmand %vm313, %vm315
        %v318 = vsel %vm316, 0.0, -inf
        %v319 = vsel %vm317, 0.0, -inf
        %v320 = vadd.s32 %v224, 32
        %v321 = vadd.s32 %v225, 32
        %vm322 = vcmp.ge.s32.totalorder %v320, 0
        %vm323 = vcmp.ge.s32.totalorder %v321, 0
        %vm324 = vcmp.lt.s32.totalorder %v320, 256
        %vm325 = vcmp.lt.s32.totalorder %v321, 256
        %vm326 = vmand %vm322, %vm324
        %vm327 = vmand %vm323, %vm325
        %v328 = vsel %vm326, 0.0, -inf
        %v329 = vsel %vm327, 0.0, -inf
        %v330 = vld [vmem:[%s1] sm:$0x3]
        %v331 = vld [vmem:[%s222] sm:$0xff]
        %v332 = vld [vmem:[%s2] sm:$0x3]
        %334 = vset.pattern.permute.xlu0 0
        %335 = vperm.xlu0 %334, %v332
        %v336 = vpop.permute.xlu0 %335
        %v339 = vcombine.high %v331, %v331
        %vm340 = vcmask 31744
        %v342 = vsel %vm340, %v330, 0
        %vm344 = vcmask 1043456
        %v345 = vsel %vm344, %v331, 0
        %v347 = vsel %vm344, %v339, 0
        %349 = vmatprep.subr.mxu0 %v347
        %350 = vmatpush1.msra.mxu0 %v345
        %351 = vmatprep.subr.mxu0 0.0
        %352 = vmatpush1.msra.mxu0 0.0
        %353 = vmatprep.subr.mxu0 0.0
        %354 = vmatpush1.msra.mxu0 0.0
        %355 = vmatprep.subr.mxu0 0.0
        %356 = vmatpush1.msra.mxu0 0.0
        %357 = vmatprep.subr.mxu0 0.0
        %358 = vmatpush1.msra.mxu0 0.0
        %359 = vmatprep.subr.mxu0 0.0
        %360 = vmatpush1.msra.mxu0 0.0
        %361 = vmatprep.subr.mxu0 0.0
        %362 = vmatpush1.msra.mxu0 0.0
        %363 = vmatprep.subr.mxu0 0.0
        %364 = vmatpush1.msra.mxu0 0.0
        %365 = vmatprep.subr.mxu0 0.0
        %366 = vmatpush1.msra.mxu0 0.0
        %367 = vmatprep.subr.mxu0 0.0
        %368 = vmatpush1.msra.mxu0 0.0
        %369 = vmatprep.subr.mxu0 0.0
        %370 = vmatpush1.msra.mxu0 0.0
        %371 = vmatprep.subr.mxu0 0.0
        %372 = vmatpush1.msra.mxu0 0.0
        %373 = vmatprep.subr.mxu0 0.0
        %374 = vmatpush1.msra.mxu0 0.0
        %375 = vmatprep.subr.mxu0 0.0
        %376 = vmatpush1.msra.mxu0 0.0
        %377 = vmatprep.subr.mxu0 0.0
        %378 = vmatpush1.msra.mxu0 0.0
        %379 = vmatprep.subr.mxu0 0.0
        %380 = vmatpush1.msra.mxu0 0.0
        %381 = vmatprep.subr.mxu0 0.0
        %382 = vmatpush1.msra.mxu0 0.0
        %383 = vmatprep.subr.mxu0 0.0
        %384 = vmatpush1.msra.mxu0 0.0
        %385 = vmatprep.subr.mxu0 0.0
        %386 = vmatpush1.msra.mxu0 0.0
        %387 = vmatprep.subr.mxu0 0.0
        %388 = vmatpush1.msra.mxu0 0.0
        %389 = vmatprep.subr.mxu0 0.0
        %390 = vmatpush1.msra.mxu0 0.0
        %391 = vmatprep.subr.mxu0 0.0
        %392 = vmatpush1.msra.mxu0 0.0
        %393 = vmatprep.subr.mxu0 0.0
        %394 = vmatpush1.msra.mxu0 0.0
        %395 = vmatprep.subr.mxu0 0.0
        %396 = vmatpush1.msra.mxu0 0.0
        %397 = vmatprep.subr.mxu0 0.0
        %398 = vmatpush1.msra.mxu0 0.0
        %399 = vmatprep.subr.mxu0 0.0
        %400 = vmatpush1.msra.mxu0 0.0
        %401 = vmatprep.subr.mxu0 0.0
        %402 = vmatpush1.msra.mxu0 0.0
        %403 = vmatprep.subr.mxu0 0.0
        %404 = vmatpush1.msra.mxu0 0.0
        %405 = vmatprep.subr.mxu0 0.0
        %406 = vmatpush1.msra.mxu0 0.0
        %407 = vmatprep.subr.mxu0 0.0
        %408 = vmatpush1.msra.mxu0 0.0
        %409 = vmatprep.subr.mxu0 0.0
        %410 = vmatpush1.msra.mxu0 0.0
        %411 = vmatprep.subr.mxu0 0.0
        %412 = vmatpush1.msra.mxu0 0.0
        %413 = vmatprep.mubr.f32.mxu0 0.0
        %414 = vmatmul.mubr.f32.gmra.mrb[0].mxu0 %v342
        %v415 = vpop.f32.mrb[0].mxu0
        %v416 = vadd.f32 %v336, %v415
        %v417 = vpop.f32.mrb[0].mxu0
        %v418 = vadd.f32 %v336, %v417
        %419 = vdwg.mxu0
        %v420 = vxor.u32 %v416, 2147483648
        %v421 = vxor.u32 %v418, 2147483648
        %v422 = vmul.f32 %v420, 1.442695
        %v423 = vpow.pop %v422
        %v424 = vmul.f32 %v421, 1.442695
        %v425 = vpow.pop %v424
        %v426 = vadd.f32 %v423, 1.0
        %v427 = vadd.f32 %v425, 1.0
        %v428 = vrcp.pop %v426
        %v429 = vmul.f32 1.0, %v428
        %v430 = vrcp.pop %v427
        %v431 = vmul.f32 1.0, %v430
        %v432 = vmul.f32 %v416, %v429
        %v433 = vmul.f32 %v418, %v431
        %v434 = vld [vmem:[%s3] sm:$0xff]
        %v435 = vld [vmem:[%s3 + $0x8] sm:$0xff]
        %v436 = vld [vmem:[%s3 + $0x10] sm:$0xff]
        %v437 = vld [vmem:[%s3 + $0x18] sm:$0xff]
        %438 = vrot.lane.b32.xlu0 %v432, 2
        %v439 = vpop.permute.xlu0 %438
        %440 = vrot.lane.b32.xlu0 %v433, 2
        %v441 = vpop.permute.xlu0 %440
        %vm442 = vcmp.lt.s32.totalorder %v224, 2
        %v443 = vsel %vm442, %v439, %v441
        %v444 = vsel %vm442, %v441, %v439
        %v445 = vadd.f32 %v444, %v258
        %v446 = vadd.f32 %v443, %v259
        %v447 = vmax.f32 %v432, %v445
        %v448 = vmax.f32 %v433, %v446
        %449 = vrot.lane.b32.xlu0 %v432, 1
        %v450 = vpop.permute.xlu0 %449
        %451 = vrot.lane.b32.xlu0 %v433, 1
        %v452 = vpop.permute.xlu0 %451
        %vm453 = vcmp.lt.s32.totalorder %v224, 1
        %v454 = vsel %vm453, %v450, %v452
        %v455 = vsel %vm453, %v452, %v450
        %v456 = vadd.f32 %v455, %v268
        %v457 = vadd.f32 %v454, %v269
        %v458 = vmax.f32 %v447, %v456
        %v459 = vmax.f32 %v448, %v457
        %460 = vrot.lane.b32.xlu0 %v432, 127
        %v461 = vpop.permute.xlu0 %460
        %462 = vrot.lane.b32.xlu0 %v433, 127
        %v463 = vpop.permute.xlu0 %462
        %vm464 = vcmp.lt.s32.totalorder %v224, 127
        %v465 = vsel %vm464, %v461, %v463
        %v466 = vsel %vm464, %v463, %v461
        %v467 = vadd.f32 %v465, %v278
        %v468 = vadd.f32 %v466, %v279
        %v469 = vmax.f32 %v458, %v467
        %v470 = vmax.f32 %v459, %v468
        %471 = vrot.lane.b32.xlu0 %v432, 126
        %v472 = vpop.permute.xlu0 %471
        %473 = vrot.lane.b32.xlu0 %v433, 126
        %v474 = vpop.permute.xlu0 %473
        %vm475 = vcmp.lt.s32.totalorder %v224, 126
        %v476 = vsel %vm475, %v472, %v474
        %v477 = vsel %vm475, %v474, %v472
        %v478 = vadd.f32 %v476, %v288
        %v479 = vadd.f32 %v477, %v289
        %v480 = vmax.f32 %v469, %v478
        %v481 = vmax.f32 %v470, %v479
        %482 = vrot.lane.b32.xlu0 %v480, 32
        %v483 = vpop.permute.xlu0 %482
        %484 = vrot.lane.b32.xlu0 %v481, 32
        %v485 = vpop.permute.xlu0 %484
        %vm486 = vcmp.lt.s32.totalorder %v224, 32
        %v487 = vsel %vm486, %v483, %v485
        %v488 = vsel %vm486, %v485, %v483
        %v489 = vadd.f32 %v488, %v298
        %v490 = vadd.f32 %v487, %v299
        %v491 = vmax.f32 %v480, %v489
        %v492 = vmax.f32 %v481, %v490
        %493 = vrot.lane.b32.xlu0 %v480, 16
        %v494 = vpop.permute.xlu0 %493
        %495 = vrot.lane.b32.xlu0 %v481, 16
        %v496 = vpop.permute.xlu0 %495
        %vm497 = vcmp.lt.s32.totalorder %v224, 16
        %v498 = vsel %vm497, %v494, %v496
        %v499 = vsel %vm497, %v496, %v494
        %v500 = vadd.f32 %v499, %v308
        %v501 = vadd.f32 %v498, %v309
        %v502 = vmax.f32 %v491, %v500
        %v503 = vmax.f32 %v492, %v501
        %504 = vrot.lane.b32.xlu0 %v480, 112
        %v505 = vpop.permute.xlu0 %504
        %506 = vrot.lane.b32.xlu0 %v481, 112
        %v507 = vpop.permute.xlu0 %506
        %vm508 = vcmp.lt.s32.totalorder %v224, 112
        %v509 = vsel %vm508, %v505, %v507
        %v510 = vsel %vm508, %v507, %v505
        %v511 = vadd.f32 %v509, %v318
        %v512 = vadd.f32 %v510, %v319
        %v513 = vmax.f32 %v502, %v511
        %v514 = vmax.f32 %v503, %v512
        %515 = vrot.lane.b32.xlu0 %v480, 96
        %v516 = vpop.permute.xlu0 %515
        %517 = vrot.lane.b32.xlu0 %v481, 96
        %v518 = vpop.permute.xlu0 %517
        %vm519 = vcmp.lt.s32.totalorder %v224, 96
        %v520 = vsel %vm519, %v516, %v518
        %v521 = vsel %vm519, %v518, %v516
        %v522 = vadd.f32 %v520, %v328
        %v523 = vadd.f32 %v521, %v329
        %v524 = vmax.f32 %v513, %v522
        %v525 = vmax.f32 %v514, %v523
        %vm526 = vcmask 15360
        %v528 = vsel %vm526, %v435, 0
        %vm530 = vcmask 1041408
        %v532 = vsel %vm530, %v524, 0
        %v535 = vsel %vm530, %v525, 0
        %537 = vmatprep.subr.mxu0 %v535
        %538 = vmatpush1.msra.mxu0 %v532
        %539 = vmatprep.subr.mxu0 0.0
        %540 = vmatpush1.msra.mxu0 0.0
        %541 = vmatprep.subr.mxu0 0.0
        %542 = vmatpush1.msra.mxu0 0.0
        %543 = vmatprep.subr.mxu0 0.0
        %544 = vmatpush1.msra.mxu0 0.0
        %545 = vmatprep.subr.mxu0 0.0
        %546 = vmatpush1.msra.mxu0 0.0
        %547 = vmatprep.subr.mxu0 0.0
        %548 = vmatpush1.msra.mxu0 0.0
        %549 = vmatprep.subr.mxu0 0.0
        %550 = vmatpush1.msra.mxu0 0.0
        %551 = vmatprep.subr.mxu0 0.0
        %552 = vmatpush1.msra.mxu0 0.0
        %553 = vmatprep.subr.mxu0 0.0
        %554 = vmatpush1.msra.mxu0 0.0
        %555 = vmatprep.subr.mxu0 0.0
        %556 = vmatpush1.msra.mxu0 0.0
        %557 = vmatprep.subr.mxu0 0.0
        %558 = vmatpush1.msra.mxu0 0.0
        %559 = vmatprep.subr.mxu0 0.0
        %560 = vmatpush1.msra.mxu0 0.0
        %561 = vmatprep.subr.mxu0 0.0
        %562 = vmatpush1.msra.mxu0 0.0
        %563 = vmatprep.subr.mxu0 0.0
        %564 = vmatpush1.msra.mxu0 0.0
        %565 = vmatprep.subr.mxu0 0.0
        %566 = vmatpush1.msra.mxu0 0.0
        %567 = vmatprep.subr.mxu0 0.0
        %568 = vmatpush1.msra.mxu0 0.0
        %569 = vmatprep.subr.mxu0 0.0
        %570 = vmatpush1.msra.mxu0 0.0
        %571 = vmatprep.subr.mxu0 0.0
        %572 = vmatpush1.msra.mxu0 0.0
        %573 = vmatprep.subr.mxu0 0.0
        %574 = vmatpush1.msra.mxu0 0.0
        %575 = vmatprep.subr.mxu0 0.0
        %576 = vmatpush1.msra.mxu0 0.0
        %577 = vmatprep.subr.mxu0 0.0
        %578 = vmatpush1.msra.mxu0 0.0
        %579 = vmatprep.subr.mxu0 0.0
        %580 = vmatpush1.msra.mxu0 0.0
        %581 = vmatprep.subr.mxu0 0.0
        %582 = vmatpush1.msra.mxu0 0.0
        %583 = vmatprep.subr.mxu0 0.0
        %584 = vmatpush1.msra.mxu0 0.0
        %585 = vmatprep.subr.mxu0 0.0
        %586 = vmatpush1.msra.mxu0 0.0
        %587 = vmatprep.subr.mxu0 0.0
        %588 = vmatpush1.msra.mxu0 0.0
        %589 = vmatprep.subr.mxu0 0.0
        %590 = vmatpush1.msra.mxu0 0.0
        %591 = vmatprep.subr.mxu0 0.0
        %592 = vmatpush1.msra.mxu0 0.0
        %593 = vmatprep.subr.mxu0 0.0
        %594 = vmatpush1.msra.mxu0 0.0
        %595 = vmatprep.subr.mxu0 0.0
        %596 = vmatpush1.msra.mxu0 0.0
        %597 = vmatprep.subr.mxu0 0.0
        %598 = vmatpush1.msra.mxu0 0.0
        %599 = vmatprep.subr.mxu0 0.0
        %600 = vmatpush1.msra.mxu0 0.0
        %601 = vmatprep.mubr.f32.mxu0 0.0
        %602 = vmatmul.mubr.f32.gmra.mrb[0].mxu0 %v528
        %v603 = vpop.f32.mrb[0].mxu0
        %v604 = vadd.f32 0.0, %v603
        %v605 = vpop.f32.mrb[0].mxu0
        %v606 = vadd.f32 0.0, %v605
        %607 = vdwg.mxu0
        %v609 = vsel %vm526, %v434, 0
        %v612 = vsel %vm530, %v432, 0
        %v615 = vsel %vm530, %v433, 0
        %617 = vmatprep.subr.mxu0 %v615
        %618 = vmatpush1.msra.mxu0 %v612
        %619 = vmatprep.subr.mxu0 0.0
        %620 = vmatpush1.msra.mxu0 0.0
        %621 = vmatprep.subr.mxu0 0.0
        %622 = vmatpush1.msra.mxu0 0.0
        %623 = vmatprep.subr.mxu0 0.0
        %624 = vmatpush1.msra.mxu0 0.0
        %625 = vmatprep.subr.mxu0 0.0
        %626 = vmatpush1.msra.mxu0 0.0
        %627 = vmatprep.subr.mxu0 0.0
        %628 = vmatpush1.msra.mxu0 0.0
        %629 = vmatprep.subr.mxu0 0.0
        %630 = vmatpush1.msra.mxu0 0.0
        %631 = vmatprep.subr.mxu0 0.0
        %632 = vmatpush1.msra.mxu0 0.0
        %633 = vmatprep.subr.mxu0 0.0
        %634 = vmatpush1.msra.mxu0 0.0
        %635 = vmatprep.subr.mxu0 0.0
        %636 = vmatpush1.msra.mxu0 0.0
        %637 = vmatprep.subr.mxu0 0.0
        %638 = vmatpush1.msra.mxu0 0.0
        %639 = vmatprep.subr.mxu0 0.0
        %640 = vmatpush1.msra.mxu0 0.0
        %641 = vmatprep.subr.mxu0 0.0
        %642 = vmatpush1.msra.mxu0 0.0
        %643 = vmatprep.subr.mxu0 0.0
        %644 = vmatpush1.msra.mxu0 0.0
        %645 = vmatprep.subr.mxu0 0.0
        %646 = vmatpush1.msra.mxu0 0.0
        %647 = vmatprep.subr.mxu0 0.0
        %648 = vmatpush1.msra.mxu0 0.0
        %649 = vmatprep.subr.mxu0 0.0
        %650 = vmatpush1.msra.mxu0 0.0
        %651 = vmatprep.subr.mxu0 0.0
        %652 = vmatpush1.msra.mxu0 0.0
        %653 = vmatprep.subr.mxu0 0.0
        %654 = vmatpush1.msra.mxu0 0.0
        %655 = vmatprep.subr.mxu0 0.0
        %656 = vmatpush1.msra.mxu0 0.0
        %657 = vmatprep.subr.mxu0 0.0
        %658 = vmatpush1.msra.mxu0 0.0
        %659 = vmatprep.subr.mxu0 0.0
        %660 = vmatpush1.msra.mxu0 0.0
        %661 = vmatprep.subr.mxu0 0.0
        %662 = vmatpush1.msra.mxu0 0.0
        %663 = vmatprep.subr.mxu0 0.0
        %664 = vmatpush1.msra.mxu0 0.0
        %665 = vmatprep.subr.mxu0 0.0
        %666 = vmatpush1.msra.mxu0 0.0
        %667 = vmatprep.subr.mxu0 0.0
        %668 = vmatpush1.msra.mxu0 0.0
        %669 = vmatprep.subr.mxu0 0.0
        %670 = vmatpush1.msra.mxu0 0.0
        %671 = vmatprep.subr.mxu0 0.0
        %672 = vmatpush1.msra.mxu0 0.0
        %673 = vmatprep.subr.mxu0 0.0
        %674 = vmatpush1.msra.mxu0 0.0
        %675 = vmatprep.subr.mxu0 0.0
        %676 = vmatpush1.msra.mxu0 0.0
        %677 = vmatprep.subr.mxu0 0.0
        %678 = vmatpush1.msra.mxu0 0.0
        %679 = vmatprep.subr.mxu0 0.0
        %680 = vmatpush1.msra.mxu0 0.0
        %681 = vmatprep.mubr.f32.mxu0 0.0
        %682 = vmatmul.mubr.f32.gmra.mrb[0].mxu0 %v609
        %v683 = vpop.f32.mrb[0].mxu0
        %v684 = vadd.f32 %v604, %v683
        %v685 = vpop.f32.mrb[0].mxu0
        %v686 = vadd.f32 %v606, %v685
        %687 = vdwg.mxu0
        %688 = vrot.lane.b32.xlu0 %v524, 2
        %v689 = vpop.permute.xlu0 %688
        %690 = vrot.lane.b32.xlu0 %v525, 2
        %v691 = vpop.permute.xlu0 %690
        %v692 = vsel %vm442, %v689, %v691
        %v693 = vsel %vm442, %v691, %v689
        %v694 = vadd.f32 %v693, %v258
        %v695 = vadd.f32 %v692, %v259
        %v696 = vmax.f32 %v524, %v694
        %v697 = vmax.f32 %v525, %v695
        %698 = vrot.lane.b32.xlu0 %v524, 1
        %v699 = vpop.permute.xlu0 %698
        %700 = vrot.lane.b32.xlu0 %v525, 1
        %v701 = vpop.permute.xlu0 %700
        %v702 = vsel %vm453, %v699, %v701
        %v703 = vsel %vm453, %v701, %v699
        %v704 = vadd.f32 %v703, %v268
        %v705 = vadd.f32 %v702, %v269
        %v706 = vmax.f32 %v696, %v704
        %v707 = vmax.f32 %v697, %v705
        %708 = vrot.lane.b32.xlu0 %v524, 127
        %v709 = vpop.permute.xlu0 %708
        %710 = vrot.lane.b32.xlu0 %v525, 127
        %v711 = vpop.permute.xlu0 %710
        %v712 = vsel %vm464, %v709, %v711
        %v713 = vsel %vm464, %v711, %v709
        %v714 = vadd.f32 %v712, %v278
        %v715 = vadd.f32 %v713, %v279
        %v716 = vmax.f32 %v706, %v714
        %v717 = vmax.f32 %v707, %v715
        %718 = vrot.lane.b32.xlu0 %v524, 126
        %v719 = vpop.permute.xlu0 %718
        %720 = vrot.lane.b32.xlu0 %v525, 126
        %v721 = vpop.permute.xlu0 %720
        %v722 = vsel %vm475, %v719, %v721
        %v723 = vsel %vm475, %v721, %v719
        %v724 = vadd.f32 %v722, %v288
        %v725 = vadd.f32 %v723, %v289
        %v726 = vmax.f32 %v716, %v724
        %v727 = vmax.f32 %v717, %v725
        %728 = vrot.lane.b32.xlu0 %v726, 32
        %v729 = vpop.permute.xlu0 %728
        %730 = vrot.lane.b32.xlu0 %v727, 32
        %v731 = vpop.permute.xlu0 %730
        %v732 = vsel %vm486, %v729, %v731
        %v733 = vsel %vm486, %v731, %v729
        %v734 = vadd.f32 %v733, %v298
        %v735 = vadd.f32 %v732, %v299
        %v736 = vmax.f32 %v726, %v734
        %v737 = vmax.f32 %v727, %v735
        %738 = vrot.lane.b32.xlu0 %v726, 16
        %v739 = vpop.permute.xlu0 %738
        %740 = vrot.lane.b32.xlu0 %v727, 16
        %v741 = vpop.permute.xlu0 %740
        %v742 = vsel %vm497, %v739, %v741
        %v743 = vsel %vm497, %v741, %v739
        %v744 = vadd.f32 %v743, %v308
        %v745 = vadd.f32 %v742, %v309
        %v746 = vmax.f32 %v736, %v744
        %v747 = vmax.f32 %v737, %v745
        %748 = vrot.lane.b32.xlu0 %v726, 112
        %v749 = vpop.permute.xlu0 %748
        %750 = vrot.lane.b32.xlu0 %v727, 112
        %v751 = vpop.permute.xlu0 %750
        %v752 = vsel %vm508, %v749, %v751
        %v753 = vsel %vm508, %v751, %v749
        %v754 = vadd.f32 %v752, %v318
        %v755 = vadd.f32 %v753, %v319
        %v756 = vmax.f32 %v746, %v754
        %v757 = vmax.f32 %v747, %v755
        %758 = vrot.lane.b32.xlu0 %v726, 96
        %v759 = vpop.permute.xlu0 %758
        %760 = vrot.lane.b32.xlu0 %v727, 96
        %v761 = vpop.permute.xlu0 %760
        %v762 = vsel %vm519, %v759, %v761
        %v763 = vsel %vm519, %v761, %v759
        %v764 = vadd.f32 %v762, %v328
        %v765 = vadd.f32 %v763, %v329
        %v766 = vmax.f32 %v756, %v764
        %v767 = vmax.f32 %v757, %v765
        %v769 = vsel %vm526, %v436, 0
        %v772 = vsel %vm530, %v766, 0
        %v775 = vsel %vm530, %v767, 0
        %777 = vmatprep.subr.mxu0 %v775
        %778 = vmatpush1.msra.mxu0 %v772
        %779 = vmatprep.subr.mxu0 0.0
        %780 = vmatpush1.msra.mxu0 0.0
        %781 = vmatprep.subr.mxu0 0.0
        %782 = vmatpush1.msra.mxu0 0.0
        %783 = vmatprep.subr.mxu0 0.0
        %784 = vmatpush1.msra.mxu0 0.0
        %785 = vmatprep.subr.mxu0 0.0
        %786 = vmatpush1.msra.mxu0 0.0
        %787 = vmatprep.subr.mxu0 0.0
        %788 = vmatpush1.msra.mxu0 0.0
        %789 = vmatprep.subr.mxu0 0.0
        %790 = vmatpush1.msra.mxu0 0.0
        %791 = vmatprep.subr.mxu0 0.0
        %792 = vmatpush1.msra.mxu0 0.0
        %793 = vmatprep.subr.mxu0 0.0
        %794 = vmatpush1.msra.mxu0 0.0
        %795 = vmatprep.subr.mxu0 0.0
        %796 = vmatpush1.msra.mxu0 0.0
        %797 = vmatprep.subr.mxu0 0.0
        %798 = vmatpush1.msra.mxu0 0.0
        %799 = vmatprep.subr.mxu0 0.0
        %800 = vmatpush1.msra.mxu0 0.0
        %801 = vmatprep.subr.mxu0 0.0
        %802 = vmatpush1.msra.mxu0 0.0
        %803 = vmatprep.subr.mxu0 0.0
        %804 = vmatpush1.msra.mxu0 0.0
        %805 = vmatprep.subr.mxu0 0.0
        %806 = vmatpush1.msra.mxu0 0.0
        %807 = vmatprep.subr.mxu0 0.0
        %808 = vmatpush1.msra.mxu0 0.0
        %809 = vmatprep.subr.mxu0 0.0
        %810 = vmatpush1.msra.mxu0 0.0
        %811 = vmatprep.subr.mxu0 0.0
        %812 = vmatpush1.msra.mxu0 0.0
        %813 = vmatprep.subr.mxu0 0.0
        %814 = vmatpush1.msra.mxu0 0.0
        %815 = vmatprep.subr.mxu0 0.0
        %816 = vmatpush1.msra.mxu0 0.0
        %817 = vmatprep.subr.mxu0 0.0
        %818 = vmatpush1.msra.mxu0 0.0
        %819 = vmatprep.subr.mxu0 0.0
        %820 = vmatpush1.msra.mxu0 0.0
        %821 = vmatprep.subr.mxu0 0.0
        %822 = vmatpush1.msra.mxu0 0.0
        %823 = vmatprep.subr.mxu0 0.0
        %824 = vmatpush1.msra.mxu0 0.0
        %825 = vmatprep.subr.mxu0 0.0
        %826 = vmatpush1.msra.mxu0 0.0
        %827 = vmatprep.subr.mxu0 0.0
        %828 = vmatpush1.msra.mxu0 0.0
        %829 = vmatprep.subr.mxu0 0.0
        %830 = vmatpush1.msra.mxu0 0.0
        %831 = vmatprep.subr.mxu0 0.0
        %832 = vmatpush1.msra.mxu0 0.0
        %833 = vmatprep.subr.mxu0 0.0
        %834 = vmatpush1.msra.mxu0 0.0
        %835 = vmatprep.subr.mxu0 0.0
        %836 = vmatpush1.msra.mxu0 0.0
        %837 = vmatprep.subr.mxu0 0.0
        %838 = vmatpush1.msra.mxu0 0.0
        %839 = vmatprep.subr.mxu0 0.0
        %840 = vmatpush1.msra.mxu0 0.0
        %841 = vmatprep.mubr.f32.mxu0 0.0
        %842 = vmatmul.mubr.f32.gmra.mrb[0].mxu0 %v769
        %v843 = vpop.f32.mrb[0].mxu0
        %v844 = vadd.f32 0.0, %v843
        %v845 = vpop.f32.mrb[0].mxu0
        %v846 = vadd.f32 0.0, %v845
        %847 = vdwg.mxu0
        %v848 = vadd.f32 %v684, %v844
        %v849 = vadd.f32 %v686, %v846
        %850 = vrot.lane.b32.xlu0 %v766, 2
        %v851 = vpop.permute.xlu0 %850
        %852 = vrot.lane.b32.xlu0 %v767, 2
        %v853 = vpop.permute.xlu0 %852
        %v854 = vsel %vm442, %v851, %v853
        %v855 = vsel %vm442, %v853, %v851
        %v856 = vadd.f32 %v855, %v258
        %v857 = vadd.f32 %v854, %v259
        %v858 = vmax.f32 %v766, %v856
        %v859 = vmax.f32 %v767, %v857
        %860 = vrot.lane.b32.xlu0 %v766, 1
        %v861 = vpop.permute.xlu0 %860
        %862 = vrot.lane.b32.xlu0 %v767, 1
        %v863 = vpop.permute.xlu0 %862
        %v864 = vsel %vm453, %v861, %v863
        %v865 = vsel %vm453, %v863, %v861
        %v866 = vadd.f32 %v865, %v268
        %v867 = vadd.f32 %v864, %v269
        %v868 = vmax.f32 %v858, %v866
        %v869 = vmax.f32 %v859, %v867
        %870 = vrot.lane.b32.xlu0 %v766, 127
        %v871 = vpop.permute.xlu0 %870
        %872 = vrot.lane.b32.xlu0 %v767, 127
        %v873 = vpop.permute.xlu0 %872
        %v874 = vsel %vm464, %v871, %v873
        %v875 = vsel %vm464, %v873, %v871
        %v876 = vadd.f32 %v874, %v278
        %v877 = vadd.f32 %v875, %v279
        %v878 = vmax.f32 %v868, %v876
        %v879 = vmax.f32 %v869, %v877
        %880 = vrot.lane.b32.xlu0 %v766, 126
        %v881 = vpop.permute.xlu0 %880
        %882 = vrot.lane.b32.xlu0 %v767, 126
        %v883 = vpop.permute.xlu0 %882
        %v884 = vsel %vm475, %v881, %v883
        %v885 = vsel %vm475, %v883, %v881
        %v886 = vadd.f32 %v884, %v288
        %v887 = vadd.f32 %v885, %v289
        %v888 = vmax.f32 %v878, %v886
        %v889 = vmax.f32 %v879, %v887
        %890 = vrot.lane.b32.xlu0 %v888, 32
        %v891 = vpop.permute.xlu0 %890
        %892 = vrot.lane.b32.xlu0 %v889, 32
        %v893 = vpop.permute.xlu0 %892
        %v894 = vsel %vm486, %v891, %v893
        %v895 = vsel %vm486, %v893, %v891
        %v896 = vadd.f32 %v895, %v298
        %v897 = vadd.f32 %v894, %v299
        %v898 = vmax.f32 %v888, %v896
        %v899 = vmax.f32 %v889, %v897
        %900 = vrot.lane.b32.xlu0 %v888, 16
        %v901 = vpop.permute.xlu0 %900
        %902 = vrot.lane.b32.xlu0 %v889, 16
        %v903 = vpop.permute.xlu0 %902
        %v904 = vsel %vm497, %v901, %v903
        %v905 = vsel %vm497, %v903, %v901
        %v906 = vadd.f32 %v905, %v308
        %v907 = vadd.f32 %v904, %v309
        %v908 = vmax.f32 %v898, %v906
        %v909 = vmax.f32 %v899, %v907
        %910 = vrot.lane.b32.xlu0 %v888, 112
        %v911 = vpop.permute.xlu0 %910
        %912 = vrot.lane.b32.xlu0 %v889, 112
        %v913 = vpop.permute.xlu0 %912
        %v914 = vsel %vm508, %v911, %v913
        %v915 = vsel %vm508, %v913, %v911
        %v916 = vadd.f32 %v914, %v318
        %v917 = vadd.f32 %v915, %v319
        %v918 = vmax.f32 %v908, %v916
        %v919 = vmax.f32 %v909, %v917
        %920 = vrot.lane.b32.xlu0 %v888, 96
        %v921 = vpop.permute.xlu0 %920
        %922 = vrot.lane.b32.xlu0 %v889, 96
        %v923 = vpop.permute.xlu0 %922
        %v924 = vsel %vm519, %v921, %v923
        %v925 = vsel %vm519, %v923, %v921
        %v926 = vadd.f32 %v924, %v328
        %v927 = vadd.f32 %v925, %v329
        %v928 = vmax.f32 %v918, %v926
        %v929 = vmax.f32 %v919, %v927
        %v931 = vsel %vm526, %v437, 0
        %v934 = vsel %vm530, %v928, 0
        %v937 = vsel %vm530, %v929, 0
        %939 = vmatprep.subr.mxu0 %v937
        %940 = vmatpush1.msra.mxu0 %v934
        %941 = vmatprep.subr.mxu0 0.0
        %942 = vmatpush1.msra.mxu0 0.0
        %943 = vmatprep.subr.mxu0 0.0
        %944 = vmatpush1.msra.mxu0 0.0
        %945 = vmatprep.subr.mxu0 0.0
        %946 = vmatpush1.msra.mxu0 0.0
        %947 = vmatprep.subr.mxu0 0.0
        %948 = vmatpush1.msra.mxu0 0.0
        %949 = vmatprep.subr.mxu0 0.0
        %950 = vmatpush1.msra.mxu0 0.0
        %951 = vmatprep.subr.mxu0 0.0
        %952 = vmatpush1.msra.mxu0 0.0
        %953 = vmatprep.subr.mxu0 0.0
        %954 = vmatpush1.msra.mxu0 0.0
        %955 = vmatprep.subr.mxu0 0.0
        %956 = vmatpush1.msra.mxu0 0.0
        %957 = vmatprep.subr.mxu0 0.0
        %958 = vmatpush1.msra.mxu0 0.0
        %959 = vmatprep.subr.mxu0 0.0
        %960 = vmatpush1.msra.mxu0 0.0
        %961 = vmatprep.subr.mxu0 0.0
        %962 = vmatpush1.msra.mxu0 0.0
        %963 = vmatprep.subr.mxu0 0.0
        %964 = vmatpush1.msra.mxu0 0.0
        %965 = vmatprep.subr.mxu0 0.0
        %966 = vmatpush1.msra.mxu0 0.0
        %967 = vmatprep.subr.mxu0 0.0
        %968 = vmatpush1.msra.mxu0 0.0
        %969 = vmatprep.subr.mxu0 0.0
        %970 = vmatpush1.msra.mxu0 0.0
        %971 = vmatprep.subr.mxu0 0.0
        %972 = vmatpush1.msra.mxu0 0.0
        %973 = vmatprep.subr.mxu0 0.0
        %974 = vmatpush1.msra.mxu0 0.0
        %975 = vmatprep.subr.mxu0 0.0
        %976 = vmatpush1.msra.mxu0 0.0
        %977 = vmatprep.subr.mxu0 0.0
        %978 = vmatpush1.msra.mxu0 0.0
        %979 = vmatprep.subr.mxu0 0.0
        %980 = vmatpush1.msra.mxu0 0.0
        %981 = vmatprep.subr.mxu0 0.0
        %982 = vmatpush1.msra.mxu0 0.0
        %983 = vmatprep.subr.mxu0 0.0
        %984 = vmatpush1.msra.mxu0 0.0
        %985 = vmatprep.subr.mxu0 0.0
        %986 = vmatpush1.msra.mxu0 0.0
        %987 = vmatprep.subr.mxu0 0.0
        %988 = vmatpush1.msra.mxu0 0.0
        %989 = vmatprep.subr.mxu0 0.0
        %990 = vmatpush1.msra.mxu0 0.0
        %991 = vmatprep.subr.mxu0 0.0
        %992 = vmatpush1.msra.mxu0 0.0
        %993 = vmatprep.subr.mxu0 0.0
        %994 = vmatpush1.msra.mxu0 0.0
        %995 = vmatprep.subr.mxu0 0.0
        %996 = vmatpush1.msra.mxu0 0.0
        %997 = vmatprep.subr.mxu0 0.0
        %998 = vmatpush1.msra.mxu0 0.0
        %999 = vmatprep.subr.mxu0 0.0
        %1000 = vmatpush1.msra.mxu0 0.0
        %1001 = vmatprep.subr.mxu0 0.0
        %1002 = vmatpush1.msra.mxu0 0.0
        %1003 = vmatprep.mubr.f32.mxu0 0.0
        %1004 = vmatmul.mubr.f32.gmra.mrb[0].mxu0 %v931
        %v1005 = vpop.f32.mrb[0].mxu0
        %v1006 = vadd.f32 0.0, %v1005
        %v1007 = vpop.f32.mrb[0].mxu0
        %v1008 = vadd.f32 0.0, %v1007
        %1009 = vdwg.mxu0
        %v1010 = vadd.f32 %v848, %v1006
        %v1011 = vadd.f32 %v849, %v1008
        %v1012 = vld [vmem:[%s4] sm:$0xff]
        %1014 = vset.pattern.permute.xlu0 0
        %1015 = vperm.xlu0 %1014, %v1012
        %v1016 = vpop.permute.xlu0 %1015
        %v1018 = vadd.f32 %v1010, %v1016
        %v1019 = vadd.f32 %v1011, %v1016
        %v1020 = vxor.u32 %v1018, 2147483648
        %v1021 = vxor.u32 %v1019, 2147483648
        %v1022 = vmul.f32 %v1020, 1.442695
        %v1023 = vpow.pop %v1022
        %v1024 = vmul.f32 %v1021, 1.442695
        %v1025 = vpow.pop %v1024
        %v1026 = vadd.f32 %v1023, 1.0
        %v1027 = vadd.f32 %v1025, 1.0
        %v1028 = vrcp.pop %v1026
        %v1029 = vmul.f32 1.0, %v1028
        %v1030 = vrcp.pop %v1027
        %v1031 = vmul.f32 1.0, %v1030
        %v1032 = vmul.f32 %v1018, %v1029
        %v1033 = vmul.f32 %v1019, %v1031
        %1034 = vst [vmem:[%s217] sm:$0xff] %v1032
        %1035 = vst [vmem:[%s217 + $0x8] sm:$0xff] %v1033
        %s1036 = sand.u32 %s137, 1
        %s1037 = scalar_lea.sflag [#allocation3], %s1036
        %s1038 = sand.u32 %s137, 1
        %s1039 = smul.addr %s1038, 16
        %s1040 = scalar_lea.vmem [#allocation2], %s1039
        // Predicated region
        $region41: #{tpu_custom_call.1} parent=39 // pred_check
          %p1041 = pneg %p147
        $region42: #{tpu_custom_call.1} parent=39 // pred_check_branch
          %1043 = sbr.rel (%p1041) target = $region44
        $region43: #{tpu_custom_call.1} parent=39 // pred_region
          %s1045 = ssub.s32 256, 256
          %1046 = vsyncadd %s1037, %s1045
          %s1047 = smul.addr %s19, 2
          %s1048 = smul.addr %s1047, 128
          %s1049 = scalar_lea.hbm %s5, %s1048
          %s1051 = sshll.u32 %s1040, 4
          %s1052 = int_to_ptr.vmem [resolvable:$true] %s1051
          %1054 = dma.vmem_to_hbm [thread:$0]  %s1052, 256, %s1049, %s1037
        $region44: #{tpu_custom_call.1} parent=39 // pred_fallthru
          _
      $region40: #{tpu_custom_call.1} parent=5 // pred_fallthru
        _
      %p1055 = scmp.le.s32.totalorder 2, %s14
      // Predicated region
      $region45: #{tpu_custom_call.1} parent=5 // pred_check
        %p1056 = pneg %p1055
      $region46: #{tpu_custom_call.1} parent=5 // pred_check_branch
        %1058 = sbr.rel (%p1056) target = $region48
      $region47: #{tpu_custom_call.1} parent=5 // pred_region
        %s1059 = ssub.s32 %s14, 2
        // Predicated region
        $region49: #{tpu_custom_call.1} parent=47 // pred_check
          %p1060 = pneg %p153
        $region50: #{tpu_custom_call.1} parent=47 // pred_check_branch
          %1062 = sbr.rel (%p1060) target = $region52
        $region51: #{tpu_custom_call.1} parent=47 // pred_region
          %s1063 = sand.u32 %s138, 1
          %s1064 = scalar_lea.sflag [#allocation3], %s1063
          %s1065 = sand.u32 %s138, 1
          %s1066 = smul.addr %s1065, 16
          %s1067 = scalar_lea.vmem [#allocation2], %s1066
          %1068 = dma.done %s1064, 256
        $region52: #{tpu_custom_call.1} parent=47 // pred_fallthru
          _
      $region48: #{tpu_custom_call.1} parent=5 // pred_fallthru
        _
    $region6: #{tpu_custom_call.1} parent=1 // loop_footer
      %s18 = sadd.s32 1, %s14
    $region7: #{tpu_custom_call.1} parent=1 // loop_footer_branch
      %13 = sbr.rel target = $region3
    $region8: #{tpu_custom_call.1} parent=1 // loop_exit
      _
    %1069 = vsyncpa [#allocation3], 1
    %s1070 = scalar_lea.sflag [#allocation3], 1
    %1071 = vsyncpa %s1070, 1

// kernel: tpu_custom_call.1
$region0: #{tpu_custom_call.1}
  #allocation0 [shape = 'u32[]', space=smem, size = 0x4, offset = 0x4, fixed_abs, tag = 'smem constant byte address 0x4 - core index']
  #allocation1 [shape = 'u32[144,128]{1,0:T(1,128)}', space=vmem, size = 0x12000, scoped, tag = 'internal scratch']
  %s0 = inlined_call_operand.vmem [shape: f32[2,4,256], index: 0, kind: input, shape index: {}]
  %s1 = inlined_call_operand.vmem [shape: f32[2,4], index: 1, kind: input, shape index: {}]
  %s2 = inlined_call_operand.vmem [shape: f32[2,1], index: 2, kind: input, shape index: {}]
  %s3 = inlined_call_operand.vmem [shape: f32[4,8,2], index: 3, kind: input, shape index: {}]
  %s4 = inlined_call_operand.vmem [shape: f32[8,1], index: 4, kind: input, shape index: {}]
  %s5 = inlined_call_operand.hbm [shape: f32[2,8,256], index: 5, kind: output, shape index: {}]
  %s6 = sld [smem:[#allocation0]]
  $region53: #{tpu_custom_call.1} parent=0
    _
  %s8 = ssub.s32 1, %s6
  %s9 = scalar_select 0, %s8, %s6
  $region1: #{tpu_custom_call.1} parent=0
    #allocation2 [shape = 'u8[16384]{0}', space=vmem, size = 0x4000, scoped, tag = 'output window, operand 0']
    #allocation3 [shape = 's32[2]{0}', space=sflag, size = 0x8, scoped, tag = 'scoped memory for tpu_custom_call.1']
    %10 = vsyncpa [#allocation3], 0
    %s11 = scalar_lea.sflag [#allocation3], 1
    %12 = vsyncpa %s11, 0
    loop: start=0, step=1, limit=4
    $region2: #{tpu_custom_call.1} parent=1 // loop_pre_header
      _
    $region3: #{tpu_custom_call.1} parent=1 // loop_header
      %s14 = sphi 0, %s18
      %p15 = scmp.ge.s32.totalorder %s14, 4
      %s24 = sphi 0, %s26
      %s27 = sphi 0, %s24
      %s28 = sphi 0, %s27
      %s44 = sphi 0, %s28
      %s48 = sphi 0, %s48
      %s50 = sphi 0, %s48
      %s51 = sphi 0, %s50
      %s65 = sphi 0, %s51
      %s69 = sphi 0, %s69
      %s71 = sphi 0, %s69
      %s72 = sphi 0, %s71
      %s86 = sphi 0, %s72
      %s90 = sphi 0, %s90
      %s92 = sphi 0, %s90
      %s93 = sphi 0, %s92
      %s107 = sphi 0, %s93
      %s111 = sphi 0, %s111
      %s113 = sphi 0, %s111
      %s114 = sphi 0, %s113
      %s128 = sphi 0, %s114
      %s134 = sphi 0, %s136
      %s137 = sphi 0, %s134
      %s138 = sphi 0, %s137
      %s154 = sphi 0, %s138
    $region4: #{tpu_custom_call.1} parent=1 // loop_header_branch
      %17 = sbr.rel (%p15) target = $region8
    $region5: #{tpu_custom_call.1} parent=1 // loop_body
      %s19 = ssub.s32 %s14, 1
      %s20 = ssub.s32 %s14, 2
      %s21 = sadd.s32 %s14, 1
      %s22 = ssub.s32 %s14, %s21
      %p23 = scmp.eq.s32.totalorder %s22, 0
      %s25 = sadd.s32 %s24, 1
      %s26 = scalar_select %p23, %s24, %s25
      %p29 = pneg %p23
      %p30 = scmp.eq.s32.totalorder %s14, 1
      %p31 = por %p29, %p30
      %p32 = scmp.ne.s32.totalorder %s24, %s27
      %p33 = scmp.eq.s32.totalorder %s14, 0
      %p34 = por %p32, %p33
      %p35 = scmp.ne.s32.totalorder %s24, %s27
      %p36 = scmp.eq.s32.totalorder %s19, 1
      %p37 = por %p35, %p36
      %p38 = scmp.ne.s32.totalorder %s27, %s28
      %p39 = scmp.eq.s32.totalorder %s19, 0
      %p40 = por %p38, %p39
      %p41 = scmp.ne.s32.totalorder %s27, %s28
      %p42 = scmp.eq.s32.totalorder %s20, 1
      %p43 = por %p41, %p42
      %p45 = scmp.ne.s32.totalorder %s28, %s44
      %p46 = scmp.eq.s32.totalorder %s20, 0
      %p47 = por %p45, %p46
      %s49 = sadd.s32 %s48, 1
      %p52 = scmp.eq.s32.totalorder %s14, 1
      %p53 = scmp.ne.s32.totalorder %s48, %s50
      %p54 = scmp.eq.s32.totalorder %s14, 0
      %p55 = por %p53, %p54
      %p56 = scmp.ne.s32.totalorder %s48, %s50
      %p57 = scmp.eq.s32.totalorder %s19, 1
      %p58 = por %p56, %p57
      %p59 = scmp.ne.s32.totalorder %s50, %s51
      %p60 = scmp.eq.s32.totalorder %s19, 0
      %p61 = por %p59, %p60
      %p62 = scmp.ne.s32.totalorder %s50, %s51
      %p63 = scmp.eq.s32.totalorder %s20, 1
      %p64 = por %p62, %p63
      %p66 = scmp.ne.s32.totalorder %s51, %s65
      %p67 = scmp.eq.s32.totalorder %s20, 0
      %p68 = por %p66, %p67
      %s70 = sadd.s32 %s69, 1
      %p73 = scmp.eq.s32.totalorder %s14, 1
      %p74 = scmp.ne.s32.totalorder %s69, %s71
      %p75 = scmp.eq.s32.totalorder %s14, 0
      %p76 = por %p74, %p75
      %p77 = scmp.ne.s32.totalorder %s69, %s71
      %p78 = scmp.eq.s32.totalorder %s19, 1
      %p79 = por %p77, %p78
      %p80 = scmp.ne.s32.totalorder %s71, %s72
      %p81 = scmp.eq.s32.totalorder %s19, 0
      %p82 = por %p80, %p81
      %p83 = scmp.ne.s32.totalorder %s71, %s72
      %p84 = scmp.eq.s32.totalorder %s20, 1
      %p85 = por %p83, %p84
      %p87 = scmp.ne.s32.totalorder %s72, %s86
      %p88 = scmp.eq.s32.totalorder %s20, 0
      %p89 = por %p87, %p88
      %s91 = sadd.s32 %s90, 1
      %p94 = scmp.eq.s32.totalorder %s14, 1
      %p95 = scmp.ne.s32.totalorder %s90, %s92
      %p96 = scmp.eq.s32.totalorder %s14, 0
      %p97 = por %p95, %p96
      %p98 = scmp.ne.s32.totalorder %s90, %s92
      %p99 = scmp.eq.s32.totalorder %s19, 1
      %p100 = por %p98, %p99
      %p101 = scmp.ne.s32.totalorder %s92, %s93
      %p102 = scmp.eq.s32.totalorder %s19, 0
      %p103 = por %p101, %p102
      %p104 = scmp.ne.s32.totalorder %s92, %s93
      %p105 = scmp.eq.s32.totalorder %s20, 1
      %p106 = por %p104, %p105
      %p108 = scmp.ne.s32.totalorder %s93, %s107
      %p109 = scmp.eq.s32.totalorder %s20, 0
      %p110 = por %p108, %p109
      %s112 = sadd.s32 %s111, 1
      %p115 = scmp.eq.s32.totalorder %s14, 1
      %p116 = scmp.ne.s32.totalorder %s111, %s113
      %p117 = scmp.eq.s32.totalorder %s14, 0
      %p118 = por %p116, %p117
      %p119 = scmp.ne.s32.totalorder %s111, %s113
      %p120 = scmp.eq.s32.totalorder %s19, 1
      %p121 = por %p119, %p120
      %p122 = scmp.ne.s32.totalorder %s113, %s114
      %p123 = scmp.eq.s32.totalorder %s19, 0
      %p124 = por %p122, %p123
      %p125 = scmp.ne.s32.totalorder %s113, %s114
      %p126 = scmp.eq.s32.totalorder %s20, 1
      %p127 = por %p125, %p126
      %p129 = scmp.ne.s32.totalorder %s114, %s128
      %p130 = scmp.eq.s32.totalorder %s20, 0
      %p131 = por %p129, %p130
      %s132 = ssub.s32 %s14, %s21
      %p133 = scmp.eq.s32.totalorder %s132, 0
      %s135 = sadd.s32 %s134, 1
      %s136 = scalar_select %p133, %s134, %s135
      %p139 = pneg %p133
      %p140 = scmp.eq.s32.totalorder %s14, 1
      %p141 = por %p139, %p140
      %p142 = scmp.ne.s32.totalorder %s134, %s137
      %p143 = scmp.eq.s32.totalorder %s14, 0
      %p144 = por %p142, %p143
      %p145 = scmp.ne.s32.totalorder %s134, %s137
      %p146 = scmp.eq.s32.totalorder %s19, 1
      %p147 = por %p145, %p146
      %p148 = scmp.ne.s32.totalorder %s137, %s138
      %p149 = scmp.eq.s32.totalorder %s19, 0
      %p150 = por %p148, %p149
      %p151 = scmp.ne.s32.totalorder %s137, %s138
      %p152 = scmp.eq.s32.totalorder %s20, 1
      %p153 = por %p151, %p152
      %p155 = scmp.ne.s32.totalorder %s138, %s154
      %p156 = scmp.eq.s32.totalorder %s20, 0
      %p157 = por %p155, %p156
      %p158 = scmp.le.s32.totalorder 1, %s14
      %p159 = scmp.lt.s32.totalorder %s14, 3
      %p160 = pnand %p158, %p159
      %p161 = pneg %p160
      // Predicated region
      $region9: #{tpu_custom_call.1} parent=5 // pred_check
        _
      $region10: #{tpu_custom_call.1} parent=5 // pred_check_branch
        %163 = sbr.rel (%p160) target = $region12
      $region11: #{tpu_custom_call.1} parent=5 // pred_region
        %s164 = ssub.s32 %s14, 1
        // Predicated region
        $region13: #{tpu_custom_call.1} parent=11 // pred_check
          %p165 = pneg %p61
        $region14: #{tpu_custom_call.1} parent=11 // pred_check_branch
          %167 = sbr.rel (%p165) target = $region16
        $region15: #{tpu_custom_call.1} parent=11 // pred_region
          _
        $region16: #{tpu_custom_call.1} parent=11 // pred_fallthru
          _
        // Predicated region
        $region17: #{tpu_custom_call.1} parent=11 // pred_check
          %p168 = pneg %p82
        $region18: #{tpu_custom_call.1} parent=11 // pred_check_branch
          %170 = sbr.rel (%p168) target = $region20
        $region19: #{tpu_custom_call.1} parent=11 // pred_region
          _
        $region20: #{tpu_custom_call.1} parent=11 // pred_fallthru
          _
        // Predicated region
        $region21: #{tpu_custom_call.1} parent=11 // pred_check
          %p171 = pneg %p103
        $region22: #{tpu_custom_call.1} parent=11 // pred_check_branch
          %173 = sbr.rel (%p171) target = $region24
        $region23: #{tpu_custom_call.1} parent=11 // pred_region
          _
        $region24: #{tpu_custom_call.1} parent=11 // pred_fallthru
          _
        // Predicated region
        $region25: #{tpu_custom_call.1} parent=11 // pred_check
          %p174 = pneg %p124
        $region26: #{tpu_custom_call.1} parent=11 // pred_check_branch
          %176 = sbr.rel (%p174) target = $region28
        $region27: #{tpu_custom_call.1} parent=11 // pred_region
          _
        $region28: #{tpu_custom_call.1} parent=11 // pred_fallthru
          _
      $region12: #{tpu_custom_call.1} parent=5 // pred_fallthru
        _
      %p177 = scmp.lt.s32.totalorder %s14, 2
      // Predicated region
      $region29: #{tpu_custom_call.1} parent=5 // pred_check
        %p178 = pneg %p177
      $region30: #{tpu_custom_call.1} parent=5 // pred_check_branch
        %180 = sbr.rel (%p178) target = $region32
      $region31: #{tpu_custom_call.1} parent=5 // pred_region
        // Predicated region
        $region33: #{tpu_custom_call.1} parent=31 // pred_check
          %p181 = pneg %p34
        $region34: #{tpu_custom_call.1} parent=31 // pred_check_branch
          %183 = sbr.rel (%p181) target = $region36
        $region35: #{tpu_custom_call.1} parent=31 // pred_region
          %p184 = scmp.lt.s32.totalorder %s14, 1
          %s185 = scalar_select %p184, %s14, 1
          %s186 = smul.addr %s185, 2
          %s187 = smul.addr %s186, 4
          %s188 = scalar_lea.vmem %s0, %s187
        $region36: #{tpu_custom_call.1} parent=31 // pred_fallthru
          _
      $region32: #{tpu_custom_call.1} parent=5 // pred_fallthru
        _
      %p189 = scmp.le.s32.totalorder 1, %s14
      %p190 = scmp.lt.s32.totalorder %s14, 3
      %p191 = pnand %p189, %p190
      %p192 = pneg %p191
      // Predicated region
      $region37: #{tpu_custom_call.1} parent=5 // pred_check
        _
      $region38: #{tpu_custom_call.1} parent=5 // pred_check_branch
        %194 = sbr.rel (%p191) target = $region40
      $region39: #{tpu_custom_call.1} parent=5 // pred_region
        %s195 = ssub.s32 %s14, 1
        %p196 = scmp.lt.s32.totalorder %s19, 1
        %s197 = scalar_select %p196, %s19, 1
        %s198 = smul.addr %s197, 2
        %s199 = smul.addr %s198, 4
        %s200 = scalar_lea.vmem %s0, %s199
        %p201 = pneg %p40
        %p202 = pneg %p37
        %p203 = pneg %p61
        %p204 = pneg %p58
        %p205 = pneg %p82
        %p206 = pneg %p79
        %p207 = pneg %p103
        %p208 = pneg %p100
        %p209 = pneg %p124
        %p210 = pneg %p121
        %p211 = pneg %p150
        %p212 = pneg %p147
        %s213 = sand.u32 %s137, 1
        %s214 = scalar_lea.sflag [#allocation3], %s213
        %s215 = sand.u32 %s137, 1
        %s216 = smul.addr %s215, 16
        %s217 = scalar_lea.vmem [#allocation2], %s216
        %p218 = scmp.lt.s32.totalorder %s19, 1
        %s219 = scalar_select %p218, %s19, 1
        %s220 = smul.addr %s219, 2
        %s221 = smul.addr %s220, 4
        %s222 = scalar_lea.vmem %s0, %s221
        %v223 = vlaneseq
        %v224 = vand.u32 %v223, 127
        %v225 = vadd.s32 %v224, 128
        %vm226 = vcmp.lt.s32.totalorder %v224, 0
        %v227 = vsub.s32 0, %v224
        %v228 = vsel %vm226, %v227, %v224
        %v229 = vshrl.u32 %v228, 4
        %v230 = vand.u32 %v228, 15
        %v231 = vsub.s32 0, %v230
        %v232 = vsel %vm226, %v231, %v230
        %vm233 = vcmp.lt.s32.totalorder %v225, 0
        %v234 = vsub.s32 0, %v225
        %v235 = vsel %vm233, %v234, %v225
        %v236 = vshrl.u32 %v235, 4
        %v237 = vand.u32 %v235, 15
        %v238 = vsub.s32 0, %v237
        %v239 = vsel %vm233, %v238, %v237
        %vm240 = vcmp.ne.s32.totalorder %v232, 0
        %vm241 = vcmp.ne.s32.totalorder %v239, 0
        %vm242 = vcmp.lt.s32.totalorder %v232, 0
        %vm243 = vcmp.lt.s32.totalorder %v239, 0
        %vm244 = vmand %vm242, %vm240
        %vm245 = vmand %vm243, %vm241
        %v246 = vadd.s32 %v232, 16
        %v247 = vadd.s32 %v239, 16
        %v248 = vsel %vm244, %v246, %v232
        %v249 = vsel %vm245, %v247, %v239
        %v250 = vadd.s32 %v248, 4294967294
        %v251 = vadd.s32 %v249, 4294967294
        %vm252 = vcmp.ge.s32.totalorder %v250, 0
        %vm253 = vcmp.ge.s32.totalorder %v251, 0
        %vm254 = vcmp.lt.s32.totalorder %v250, 16
        %vm255 = vcmp.lt.s32.totalorder %v251, 16
        %vm256 = vmand %vm252, %vm254
        %vm257 = vmand %vm253, %vm255
        %v258 = vsel %vm256, 0.0, -inf
        %v259 = vsel %vm257, 0.0, -inf
        %v260 = vadd.s32 %v248, 4294967295
        %v261 = vadd.s32 %v249, 4294967295
        %vm262 = vcmp.ge.s32.totalorder %v260, 0
        %vm263 = vcmp.ge.s32.totalorder %v261, 0
        %vm264 = vcmp.lt.s32.totalorder %v260, 16
        %vm265 = vcmp.lt.s32.totalorder %v261, 16
        %vm266 = vmand %vm262, %vm264
        %vm267 = vmand %vm263, %vm265
        %v268 = vsel %vm266, 0.0, -inf
        %v269 = vsel %vm267, 0.0, -inf
        %v270 = vadd.s32 %v248, 1
        %v271 = vadd.s32 %v249, 1
        %vm272 = vcmp.ge.s32.totalorder %v270, 0
        %vm273 = vcmp.ge.s32.totalorder %v271, 0
        %vm274 = vcmp.lt.s32.totalorder %v270, 16
        %vm275 = vcmp.lt.s32.totalorder %v271, 16
        %vm276 = vmand %vm272, %vm274
        %vm277 = vmand %vm273, %vm275
        %v278 = vsel %vm276, 0.0, -inf
        %v279 = vsel %vm277, 0.0, -inf
        %v280 = vadd.s32 %v248, 2
        %v281 = vadd.s32 %v249, 2
        %vm282 = vcmp.ge.s32.totalorder %v280, 0
        %vm283 = vcmp.ge.s32.totalorder %v281, 0
        %vm284 = vcmp.lt.s32.totalorder %v280, 16
        %vm285 = vcmp.lt.s32.totalorder %v281, 16
        %vm286 = vmand %vm282, %vm284
        %vm287 = vmand %vm283, %vm285
        %v288 = vsel %vm286, 0.0, -inf
        %v289 = vsel %vm287, 0.0, -inf
        %v290 = vadd.s32 %v224, 4294967264
        %v291 = vadd.s32 %v225, 4294967264
        %vm292 = vcmp.ge.s32.totalorder %v290, 0
        %vm293 = vcmp.ge.s32.totalorder %v291, 0
        %vm294 = vcmp.lt.s32.totalorder %v290, 256
        %vm295 = vcmp.lt.s32.totalorder %v291, 256
        %vm296 = vmand %vm292, %vm294
        %vm297 = vmand %vm293, %vm295
        %v298 = vsel %vm296, 0.0, -inf
        %v299 = vsel %vm297, 0.0, -inf
        %v300 = vadd.s32 %v224, 4294967280
        %v301 = vadd.s32 %v225, 4294967280
        %vm302 = vcmp.ge.s32.totalorder %v300, 0
        %vm303 = vcmp.ge.s32.totalorder %v301, 0
        %vm304 = vcmp.lt.s32.totalorder %v300, 256
        %vm305 = vcmp.lt.s32.totalorder %v301, 256
        %vm306 = vmand %vm302, %vm304
        %vm307 = vmand %vm303, %vm305
        %v308 = vsel %vm306, 0.0, -inf
        %v309 = vsel %vm307, 0.0, -inf
        %v310 = vadd.s32 %v224, 16
        %v311 = vadd.s32 %v225, 16
        %vm312 = vcmp.ge.s32.totalorder %v310, 0
        %vm313 = vcmp.ge.s32.totalorder %v311, 0
        %vm314 = vcmp.lt.s32.totalorder %v310, 256
        %vm315 = vcmp.lt.s32.totalorder %v311, 256
        %vm316 = vmand %vm312, %vm314
        %vm317 = vmand %vm313, %vm315
        %v318 = vsel %vm316, 0.0, -inf
        %v319 = vsel %vm317, 0.0, -inf
        %v320 = vadd.s32 %v224, 32
        %v321 = vadd.s32 %v225, 32
        %vm322 = vcmp.ge.s32.totalorder %v320, 0
        %vm323 = vcmp.ge.s32.totalorder %v321, 0
        %vm324 = vcmp.lt.s32.totalorder %v320, 256
        %vm325 = vcmp.lt.s32.totalorder %v321, 256
        %vm326 = vmand %vm322, %vm324
        %vm327 = vmand %vm323, %vm325
        %v328 = vsel %vm326, 0.0, -inf
        %v329 = vsel %vm327, 0.0, -inf
        %v330 = vld [vmem:[%s1] sm:$0x3]
        %v331 = vld [vmem:[%s222] sm:$0xff]
        %v332 = vld [vmem:[%s2] sm:$0x3]
        %334 = vset.pattern.permute.xlu0 0
        %335 = vperm.xlu0 %334, %v332
        %v336 = vpop.permute.xlu0 %335
        %v339 = vcombine.high %v331, %v331
        %vm340 = vcmask 31744
        %v342 = vsel %vm340, %v330, 0
        %vm344 = vcmask 1043456
        %v345 = vsel %vm344, %v331, 0
        %v347 = vsel %vm344, %v339, 0
        %349 = vmatprep.subr.mxu0 %v347
        %350 = vmatpush1.msra.mxu0 %v345
        %351 = vmatprep.subr.mxu0 0.0
        %352 = vmatpush1.msra.mxu0 0.0
        %353 = vmatprep.subr.mxu0 0.0
        %354 = vmatpush1.msra.mxu0 0.0
        %355 = vmatprep.subr.mxu0 0.0
        %356 = vmatpush1.msra.mxu0 0.0
        %357 = vmatprep.subr.mxu0 0.0
        %358 = vmatpush1.msra.mxu0 0.0
        %359 = vmatprep.subr.mxu0 0.0
        %360 = vmatpush1.msra.mxu0 0.0
        %361 = vmatprep.subr.mxu0 0.0
        %362 = vmatpush1.msra.mxu0 0.0
        %363 = vmatprep.subr.mxu0 0.0
        %364 = vmatpush1.msra.mxu0 0.0
        %365 = vmatprep.subr.mxu0 0.0
        %366 = vmatpush1.msra.mxu0 0.0
        %367 = vmatprep.subr.mxu0 0.0
        %368 = vmatpush1.msra.mxu0 0.0
        %369 = vmatprep.subr.mxu0 0.0
        %370 = vmatpush1.msra.mxu0 0.0
        %371 = vmatprep.subr.mxu0 0.0
        %372 = vmatpush1.msra.mxu0 0.0
        %373 = vmatprep.subr.mxu0 0.0
        %374 = vmatpush1.msra.mxu0 0.0
        %375 = vmatprep.subr.mxu0 0.0
        %376 = vmatpush1.msra.mxu0 0.0
        %377 = vmatprep.subr.mxu0 0.0
        %378 = vmatpush1.msra.mxu0 0.0
        %379 = vmatprep.subr.mxu0 0.0
        %380 = vmatpush1.msra.mxu0 0.0
        %381 = vmatprep.subr.mxu0 0.0
        %382 = vmatpush1.msra.mxu0 0.0
        %383 = vmatprep.subr.mxu0 0.0
        %384 = vmatpush1.msra.mxu0 0.0
        %385 = vmatprep.subr.mxu0 0.0
        %386 = vmatpush1.msra.mxu0 0.0
        %387 = vmatprep.subr.mxu0 0.0
        %388 = vmatpush1.msra.mxu0 0.0
        %389 = vmatprep.subr.mxu0 0.0
        %390 = vmatpush1.msra.mxu0 0.0
        %391 = vmatprep.subr.mxu0 0.0
        %392 = vmatpush1.msra.mxu0 0.0
        %393 = vmatprep.subr.mxu0 0.0
        %394 = vmatpush1.msra.mxu0 0.0
        %395 = vmatprep.subr.mxu0 0.0
        %396 = vmatpush1.msra.mxu0 0.0
        %397 = vmatprep.subr.mxu0 0.0
        %398 = vmatpush1.msra.mxu0 0.0
        %399 = vmatprep.subr.mxu0 0.0
        %400 = vmatpush1.msra.mxu0 0.0
        %401 = vmatprep.subr.mxu0 0.0
        %402 = vmatpush1.msra.mxu0 0.0
        %403 = vmatprep.subr.mxu0 0.0
        %404 = vmatpush1.msra.mxu0 0.0
        %405 = vmatprep.subr.mxu0 0.0
        %406 = vmatpush1.msra.mxu0 0.0
        %407 = vmatprep.subr.mxu0 0.0
        %408 = vmatpush1.msra.mxu0 0.0
        %409 = vmatprep.subr.mxu0 0.0
        %410 = vmatpush1.msra.mxu0 0.0
        %411 = vmatprep.subr.mxu0 0.0
        %412 = vmatpush1.msra.mxu0 0.0
        %413 = vmatprep.mubr.f32.mxu0 0.0
        %414 = vmatmul.mubr.f32.gmra.mrb[0].mxu0 %v342
        %v415 = vpop.f32.mrb[0].mxu0
        %v416 = vadd.f32 %v336, %v415
        %v417 = vpop.f32.mrb[0].mxu0
        %v418 = vadd.f32 %v336, %v417
        %419 = vdwg.mxu0
        %v420 = vxor.u32 %v416, 2147483648
        %v421 = vxor.u32 %v418, 2147483648
        %v422 = vmul.f32 %v420, 1.442695
        %v423 = vpow.pop %v422
        %v424 = vmul.f32 %v421, 1.442695
        %v425 = vpow.pop %v424
        %v426 = vadd.f32 %v423, 1.0
        %v427 = vadd.f32 %v425, 1.0
        %v428 = vrcp.pop %v426
        %v429 = vmul.f32 1.0, %v428
        %v430 = vrcp.pop %v427
        %v431 = vmul.f32 1.0, %v430
        %v432 = vmul.f32 %v416, %v429
        %v433 = vmul.f32 %v418, %v431
        %v434 = vld [vmem:[%s3] sm:$0xff]
        %v435 = vld [vmem:[%s3 + $0x8] sm:$0xff]
        %v436 = vld [vmem:[%s3 + $0x10] sm:$0xff]
        %v437 = vld [vmem:[%s3 + $0x18] sm:$0xff]
        %438 = vrot.lane.b32.xlu0 %v432, 2
        %v439 = vpop.permute.xlu0 %438
        %440 = vrot.lane.b32.xlu0 %v433, 2
        %v441 = vpop.permute.xlu0 %440
        %vm442 = vcmp.lt.s32.totalorder %v224, 2
        %v443 = vsel %vm442, %v439, %v441
        %v444 = vsel %vm442, %v441, %v439
        %v445 = vadd.f32 %v444, %v258
        %v446 = vadd.f32 %v443, %v259
        %v447 = vmax.f32 %v432, %v445
        %v448 = vmax.f32 %v433, %v446
        %449 = vrot.lane.b32.xlu0 %v432, 1
        %v450 = vpop.permute.xlu0 %449
        %451 = vrot.lane.b32.xlu0 %v433, 1
        %v452 = vpop.permute.xlu0 %451
        %vm453 = vcmp.lt.s32.totalorder %v224, 1
        %v454 = vsel %vm453, %v450, %v452
        %v455 = vsel %vm453, %v452, %v450
        %v456 = vadd.f32 %v455, %v268
        %v457 = vadd.f32 %v454, %v269
        %v458 = vmax.f32 %v447, %v456
        %v459 = vmax.f32 %v448, %v457
        %460 = vrot.lane.b32.xlu0 %v432, 127
        %v461 = vpop.permute.xlu0 %460
        %462 = vrot.lane.b32.xlu0 %v433, 127
        %v463 = vpop.permute.xlu0 %462
        %vm464 = vcmp.lt.s32.totalorder %v224, 127
        %v465 = vsel %vm464, %v461, %v463
        %v466 = vsel %vm464, %v463, %v461
        %v467 = vadd.f32 %v465, %v278
        %v468 = vadd.f32 %v466, %v279
        %v469 = vmax.f32 %v458, %v467
        %v470 = vmax.f32 %v459, %v468
        %471 = vrot.lane.b32.xlu0 %v432, 126
        %v472 = vpop.permute.xlu0 %471
        %473 = vrot.lane.b32.xlu0 %v433, 126
        %v474 = vpop.permute.xlu0 %473
        %vm475 = vcmp.lt.s32.totalorder %v224, 126
        %v476 = vsel %vm475, %v472, %v474
        %v477 = vsel %vm475, %v474, %v472
        %v478 = vadd.f32 %v476, %v288
        %v479 = vadd.f32 %v477, %v289
        %v480 = vmax.f32 %v469, %v478
        %v481 = vmax.f32 %v470, %v479
        %482 = vrot.lane.b32.xlu0 %v480, 32
        %v483 = vpop.permute.xlu0 %482
        %484 = vrot.lane.b32.xlu0 %v481, 32
        %v485 = vpop.permute.xlu0 %484
        %vm486 = vcmp.lt.s32.totalorder %v224, 32
        %v487 = vsel %vm486, %v483, %v485
        %v488 = vsel %vm486, %v485, %v483
        %v489 = vadd.f32 %v488, %v298
        %v490 = vadd.f32 %v487, %v299
        %v491 = vmax.f32 %v480, %v489
        %v492 = vmax.f32 %v481, %v490
        %493 = vrot.lane.b32.xlu0 %v480, 16
        %v494 = vpop.permute.xlu0 %493
        %495 = vrot.lane.b32.xlu0 %v481, 16
        %v496 = vpop.permute.xlu0 %495
        %vm497 = vcmp.lt.s32.totalorder %v224, 16
        %v498 = vsel %vm497, %v494, %v496
        %v499 = vsel %vm497, %v496, %v494
        %v500 = vadd.f32 %v499, %v308
        %v501 = vadd.f32 %v498, %v309
        %v502 = vmax.f32 %v491, %v500
        %v503 = vmax.f32 %v492, %v501
        %504 = vrot.lane.b32.xlu0 %v480, 112
        %v505 = vpop.permute.xlu0 %504
        %506 = vrot.lane.b32.xlu0 %v481, 112
        %v507 = vpop.permute.xlu0 %506
        %vm508 = vcmp.lt.s32.totalorder %v224, 112
        %v509 = vsel %vm508, %v505, %v507
        %v510 = vsel %vm508, %v507, %v505
        %v511 = vadd.f32 %v509, %v318
        %v512 = vadd.f32 %v510, %v319
        %v513 = vmax.f32 %v502, %v511
        %v514 = vmax.f32 %v503, %v512
        %515 = vrot.lane.b32.xlu0 %v480, 96
        %v516 = vpop.permute.xlu0 %515
        %517 = vrot.lane.b32.xlu0 %v481, 96
        %v518 = vpop.permute.xlu0 %517
        %vm519 = vcmp.lt.s32.totalorder %v224, 96
        %v520 = vsel %vm519, %v516, %v518
        %v521 = vsel %vm519, %v518, %v516
        %v522 = vadd.f32 %v520, %v328
        %v523 = vadd.f32 %v521, %v329
        %v524 = vmax.f32 %v513, %v522
        %v525 = vmax.f32 %v514, %v523
        %vm526 = vcmask 15360
        %v528 = vsel %vm526, %v435, 0
        %vm530 = vcmask 1041408
        %v532 = vsel %vm530, %v524, 0
        %v535 = vsel %vm530, %v525, 0
        %537 = vmatprep.subr.mxu0 %v535
        %538 = vmatpush1.msra.mxu0 %v532
        %539 = vmatprep.subr.mxu0 0.0
        %540 = vmatpush1.msra.mxu0 0.0
        %541 = vmatprep.subr.mxu0 0.0
        %542 = vmatpush1.msra.mxu0 0.0
        %543 = vmatprep.subr.mxu0 0.0
        %544 = vmatpush1.msra.mxu0 0.0
        %545 = vmatprep.subr.mxu0 0.0
        %546 = vmatpush1.msra.mxu0 0.0
        %547 = vmatprep.subr.mxu0 0.0
        %548 = vmatpush1.msra.mxu0 0.0
        %549 = vmatprep.subr.mxu0 0.0
        %550 = vmatpush1.msra.mxu0 0.0
        %551 = vmatprep.subr.mxu0 0.0
        %552 = vmatpush1.msra.mxu0 0.0
        %553 = vmatprep.subr.mxu0 0.0
        %554 = vmatpush1.msra.mxu0 0.0
        %555 = vmatprep.subr.mxu0 0.0
        %556 = vmatpush1.msra.mxu0 0.0
        %557 = vmatprep.subr.mxu0 0.0
        %558 = vmatpush1.msra.mxu0 0.0
        %559 = vmatprep.subr.mxu0 0.0
        %560 = vmatpush1.msra.mxu0 0.0
        %561 = vmatprep.subr.mxu0 0.0
        %562 = vmatpush1.msra.mxu0 0.0
        %563 = vmatprep.subr.mxu0 0.0
        %564 = vmatpush1.msra.mxu0 0.0
        %565 = vmatprep.subr.mxu0 0.0
        %566 = vmatpush1.msra.mxu0 0.0
        %567 = vmatprep.subr.mxu0 0.0
        %568 = vmatpush1.msra.mxu0 0.0
        %569 = vmatprep.subr.mxu0 0.0
        %570 = vmatpush1.msra.mxu0 0.0
        %571 = vmatprep.subr.mxu0 0.0
        %572 = vmatpush1.msra.mxu0 0.0
        %573 = vmatprep.subr.mxu0 0.0
        %574 = vmatpush1.msra.mxu0 0.0
        %575 = vmatprep.subr.mxu0 0.0
        %576 = vmatpush1.msra.mxu0 0.0
        %577 = vmatprep.subr.mxu0 0.0
        %578 = vmatpush1.msra.mxu0 0.0
        %579 = vmatprep.subr.mxu0 0.0
        %580 = vmatpush1.msra.mxu0 0.0
        %581 = vmatprep.subr.mxu0 0.0
        %582 = vmatpush1.msra.mxu0 0.0
        %583 = vmatprep.subr.mxu0 0.0
        %584 = vmatpush1.msra.mxu0 0.0
        %585 = vmatprep.subr.mxu0 0.0
        %586 = vmatpush1.msra.mxu0 0.0
        %587 = vmatprep.subr.mxu0 0.0
        %588 = vmatpush1.msra.mxu0 0.0
        %589 = vmatprep.subr.mxu0 0.0
        %590 = vmatpush1.msra.mxu0 0.0
        %591 = vmatprep.subr.mxu0 0.0
        %592 = vmatpush1.msra.mxu0 0.0
        %593 = vmatprep.subr.mxu0 0.0
        %594 = vmatpush1.msra.mxu0 0.0
        %595 = vmatprep.subr.mxu0 0.0
        %596 = vmatpush1.msra.mxu0 0.0
        %597 = vmatprep.subr.mxu0 0.0
        %598 = vmatpush1.msra.mxu0 0.0
        %599 = vmatprep.subr.mxu0 0.0
        %600 = vmatpush1.msra.mxu0 0.0
        %601 = vmatprep.mubr.f32.mxu0 0.0
        %602 = vmatmul.mubr.f32.gmra.mrb[0].mxu0 %v528
        %v603 = vpop.f32.mrb[0].mxu0
        %v604 = vadd.f32 0.0, %v603
        %v605 = vpop.f32.mrb[0].mxu0
        %v606 = vadd.f32 0.0, %v605
        %607 = vdwg.mxu0
        %v609 = vsel %vm526, %v434, 0
        %v612 = vsel %vm530, %v432, 0
        %v615 = vsel %vm530, %v433, 0
        %617 = vmatprep.subr.mxu0 %v615
        %618 = vmatpush1.msra.mxu0 %v612
        %619 = vmatprep.subr.mxu0 0.0
        %620 = vmatpush1.msra.mxu0 0.0
        %621 = vmatprep.subr.mxu0 0.0
        %622 = vmatpush1.msra.mxu0 0.0
        %623 = vmatprep.subr.mxu0 0.0
        %624 = vmatpush1.msra.mxu0 0.0
        %625 = vmatprep.subr.mxu0 0.0
        %626 = vmatpush1.msra.mxu0 0.0
        %627 = vmatprep.subr.mxu0 0.0
        %628 = vmatpush1.msra.mxu0 0.0
        %629 = vmatprep.subr.mxu0 0.0
        %630 = vmatpush1.msra.mxu0 0.0
        %631 = vmatprep.subr.mxu0 0.0
        %632 = vmatpush1.msra.mxu0 0.0
        %633 = vmatprep.subr.mxu0 0.0
        %634 = vmatpush1.msra.mxu0 0.0
        %635 = vmatprep.subr.mxu0 0.0
        %636 = vmatpush1.msra.mxu0 0.0
        %637 = vmatprep.subr.mxu0 0.0
        %638 = vmatpush1.msra.mxu0 0.0
        %639 = vmatprep.subr.mxu0 0.0
        %640 = vmatpush1.msra.mxu0 0.0
        %641 = vmatprep.subr.mxu0 0.0
        %642 = vmatpush1.msra.mxu0 0.0
        %643 = vmatprep.subr.mxu0 0.0
        %644 = vmatpush1.msra.mxu0 0.0
        %645 = vmatprep.subr.mxu0 0.0
        %646 = vmatpush1.msra.mxu0 0.0
        %647 = vmatprep.subr.mxu0 0.0
        %648 = vmatpush1.msra.mxu0 0.0
        %649 = vmatprep.subr.mxu0 0.0
        %650 = vmatpush1.msra.mxu0 0.0
        %651 = vmatprep.subr.mxu0 0.0
        %652 = vmatpush1.msra.mxu0 0.0
        %653 = vmatprep.subr.mxu0 0.0
        %654 = vmatpush1.msra.mxu0 0.0
        %655 = vmatprep.subr.mxu0 0.0
        %656 = vmatpush1.msra.mxu0 0.0
        %657 = vmatprep.subr.mxu0 0.0
        %658 = vmatpush1.msra.mxu0 0.0
        %659 = vmatprep.subr.mxu0 0.0
        %660 = vmatpush1.msra.mxu0 0.0
        %661 = vmatprep.subr.mxu0 0.0
        %662 = vmatpush1.msra.mxu0 0.0
        %663 = vmatprep.subr.mxu0 0.0
        %664 = vmatpush1.msra.mxu0 0.0
        %665 = vmatprep.subr.mxu0 0.0
        %666 = vmatpush1.msra.mxu0 0.0
        %667 = vmatprep.subr.mxu0 0.0
        %668 = vmatpush1.msra.mxu0 0.0
        %669 = vmatprep.subr.mxu0 0.0
        %670 = vmatpush1.msra.mxu0 0.0
        %671 = vmatprep.subr.mxu0 0.0
        %672 = vmatpush1.msra.mxu0 0.0
        %673 = vmatprep.subr.mxu0 0.0
        %674 = vmatpush1.msra.mxu0 0.0
        %675 = vmatprep.subr.mxu0 0.0
        %676 = vmatpush1.msra.mxu0 0.0
        %677 = vmatprep.subr.mxu0 0.0
        %678 = vmatpush1.msra.mxu0 0.0
        %679 = vmatprep.subr.mxu0 0.0
        %680 = vmatpush1.msra.mxu0 0.0
        %681 = vmatprep.mubr.f32.mxu0 0.0
        %682 = vmatmul.mubr.f32.gmra.mrb[0].mxu0 %v609
        %v683 = vpop.f32.mrb[0].mxu0
        %v684 = vadd.f32 %v604, %v683
        %v685 = vpop.f32.mrb[0].mxu0
        %v686 = vadd.f32 %v606, %v685
        %687 = vdwg.mxu0
        %688 = vrot.lane.b32.xlu0 %v524, 2
        %v689 = vpop.permute.xlu0 %688
        %690 = vrot.lane.b32.xlu0 %v525, 2
        %v691 = vpop.permute.xlu0 %690
        %v692 = vsel %vm442, %v689, %v691
        %v693 = vsel %vm442, %v691, %v689
        %v694 = vadd.f32 %v693, %v258
        %v695 = vadd.f32 %v692, %v259
        %v696 = vmax.f32 %v524, %v694
        %v697 = vmax.f32 %v525, %v695
        %698 = vrot.lane.b32.xlu0 %v524, 1
        %v699 = vpop.permute.xlu0 %698
        %700 = vrot.lane.b32.xlu0 %v525, 1
        %v701 = vpop.permute.xlu0 %700
        %v702 = vsel %vm453, %v699, %v701
        %v703 = vsel %vm453, %v701, %v699
        %v704 = vadd.f32 %v703, %v268
        %v705 = vadd.f32 %v702, %v269
        %v706 = vmax.f32 %v696, %v704
        %v707 = vmax.f32 %v697, %v705
        %708 = vrot.lane.b32.xlu0 %v524, 127
        %v709 = vpop.permute.xlu0 %708
        %710 = vrot.lane.b32.xlu0 %v525, 127
        %v711 = vpop.permute.xlu0 %710
        %v712 = vsel %vm464, %v709, %v711
        %v713 = vsel %vm464, %v711, %v709
        %v714 = vadd.f32 %v712, %v278
        %v715 = vadd.f32 %v713, %v279
        %v716 = vmax.f32 %v706, %v714
        %v717 = vmax.f32 %v707, %v715
        %718 = vrot.lane.b32.xlu0 %v524, 126
        %v719 = vpop.permute.xlu0 %718
        %720 = vrot.lane.b32.xlu0 %v525, 126
        %v721 = vpop.permute.xlu0 %720
        %v722 = vsel %vm475, %v719, %v721
        %v723 = vsel %vm475, %v721, %v719
        %v724 = vadd.f32 %v722, %v288
        %v725 = vadd.f32 %v723, %v289
        %v726 = vmax.f32 %v716, %v724
        %v727 = vmax.f32 %v717, %v725
        %728 = vrot.lane.b32.xlu0 %v726, 32
        %v729 = vpop.permute.xlu0 %728
        %730 = vrot.lane.b32.xlu0 %v727, 32
        %v731 = vpop.permute.xlu0 %730
        %v732 = vsel %vm486, %v729, %v731
        %v733 = vsel %vm486, %v731, %v729
        %v734 = vadd.f32 %v733, %v298
        %v735 = vadd.f32 %v732, %v299
        %v736 = vmax.f32 %v726, %v734
        %v737 = vmax.f32 %v727, %v735
        %738 = vrot.lane.b32.xlu0 %v726, 16
        %v739 = vpop.permute.xlu0 %738
        %740 = vrot.lane.b32.xlu0 %v727, 16
        %v741 = vpop.permute.xlu0 %740
        %v742 = vsel %vm497, %v739, %v741
        %v743 = vsel %vm497, %v741, %v739
        %v744 = vadd.f32 %v743, %v308
        %v745 = vadd.f32 %v742, %v309
        %v746 = vmax.f32 %v736, %v744
        %v747 = vmax.f32 %v737, %v745
        %748 = vrot.lane.b32.xlu0 %v726, 112
        %v749 = vpop.permute.xlu0 %748
        %750 = vrot.lane.b32.xlu0 %v727, 112
        %v751 = vpop.permute.xlu0 %750
        %v752 = vsel %vm508, %v749, %v751
        %v753 = vsel %vm508, %v751, %v749
        %v754 = vadd.f32 %v752, %v318
        %v755 = vadd.f32 %v753, %v319
        %v756 = vmax.f32 %v746, %v754
        %v757 = vmax.f32 %v747, %v755
        %758 = vrot.lane.b32.xlu0 %v726, 96
        %v759 = vpop.permute.xlu0 %758
        %760 = vrot.lane.b32.xlu0 %v727, 96
        %v761 = vpop.permute.xlu0 %760
        %v762 = vsel %vm519, %v759, %v761
        %v763 = vsel %vm519, %v761, %v759
        %v764 = vadd.f32 %v762, %v328
        %v765 = vadd.f32 %v763, %v329
        %v766 = vmax.f32 %v756, %v764
        %v767 = vmax.f32 %v757, %v765
        %v769 = vsel %vm526, %v436, 0
        %v772 = vsel %vm530, %v766, 0
        %v775 = vsel %vm530, %v767, 0
        %777 = vmatprep.subr.mxu0 %v775
        %778 = vmatpush1.msra.mxu0 %v772
        %779 = vmatprep.subr.mxu0 0.0
        %780 = vmatpush1.msra.mxu0 0.0
        %781 = vmatprep.subr.mxu0 0.0
        %782 = vmatpush1.msra.mxu0 0.0
        %783 = vmatprep.subr.mxu0 0.0
        %784 = vmatpush1.msra.mxu0 0.0
        %785 = vmatprep.subr.mxu0 0.0
        %786 = vmatpush1.msra.mxu0 0.0
        %787 = vmatprep.subr.mxu0 0.0
        %788 = vmatpush1.msra.mxu0 0.0
        %789 = vmatprep.subr.mxu0 0.0
        %790 = vmatpush1.msra.mxu0 0.0
        %791 = vmatprep.subr.mxu0 0.0
        %792 = vmatpush1.msra.mxu0 0.0
        %793 = vmatprep.subr.mxu0 0.0
        %794 = vmatpush1.msra.mxu0 0.0
        %795 = vmatprep.subr.mxu0 0.0
        %796 = vmatpush1.msra.mxu0 0.0
        %797 = vmatprep.subr.mxu0 0.0
        %798 = vmatpush1.msra.mxu0 0.0
        %799 = vmatprep.subr.mxu0 0.0
        %800 = vmatpush1.msra.mxu0 0.0
        %801 = vmatprep.subr.mxu0 0.0
        %802 = vmatpush1.msra.mxu0 0.0
        %803 = vmatprep.subr.mxu0 0.0
        %804 = vmatpush1.msra.mxu0 0.0
        %805 = vmatprep.subr.mxu0 0.0
        %806 = vmatpush1.msra.mxu0 0.0
        %807 = vmatprep.subr.mxu0 0.0
        %808 = vmatpush1.msra.mxu0 0.0
        %809 = vmatprep.subr.mxu0 0.0
        %810 = vmatpush1.msra.mxu0 0.0
        %811 = vmatprep.subr.mxu0 0.0
        %812 = vmatpush1.msra.mxu0 0.0
        %813 = vmatprep.subr.mxu0 0.0
        %814 = vmatpush1.msra.mxu0 0.0
        %815 = vmatprep.subr.mxu0 0.0
        %816 = vmatpush1.msra.mxu0 0.0
        %817 = vmatprep.subr.mxu0 0.0
        %818 = vmatpush1.msra.mxu0 0.0
        %819 = vmatprep.subr.mxu0 0.0
        %820 = vmatpush1.msra.mxu0 0.0
        %821 = vmatprep.subr.mxu0 0.0
        %822 = vmatpush1.msra.mxu0 0.0
        %823 = vmatprep.subr.mxu0 0.0
        %824 = vmatpush1.msra.mxu0 0.0
        %825 = vmatprep.subr.mxu0 0.0
        %826 = vmatpush1.msra.mxu0 0.0
        %827 = vmatprep.subr.mxu0 0.0
        %828 = vmatpush1.msra.mxu0 0.0
        %829 = vmatprep.subr.mxu0 0.0
        %830 = vmatpush1.msra.mxu0 0.0
        %831 = vmatprep.subr.mxu0 0.0
        %832 = vmatpush1.msra.mxu0 0.0
        %833 = vmatprep.subr.mxu0 0.0
        %834 = vmatpush1.msra.mxu0 0.0
        %835 = vmatprep.subr.mxu0 0.0
        %836 = vmatpush1.msra.mxu0 0.0
        %837 = vmatprep.subr.mxu0 0.0
        %838 = vmatpush1.msra.mxu0 0.0
        %839 = vmatprep.subr.mxu0 0.0
        %840 = vmatpush1.msra.mxu0 0.0
        %841 = vmatprep.mubr.f32.mxu0 0.0
        %842 = vmatmul.mubr.f32.gmra.mrb[0].mxu0 %v769
        %v843 = vpop.f32.mrb[0].mxu0
        %v844 = vadd.f32 0.0, %v843
        %v845 = vpop.f32.mrb[0].mxu0
        %v846 = vadd.f32 0.0, %v845
        %847 = vdwg.mxu0
        %v848 = vadd.f32 %v684, %v844
        %v849 = vadd.f32 %v686, %v846
        %850 = vrot.lane.b32.xlu0 %v766, 2
        %v851 = vpop.permute.xlu0 %850
        %852 = vrot.lane.b32.xlu0 %v767, 2
        %v853 = vpop.permute.xlu0 %852
        %v854 = vsel %vm442, %v851, %v853
        %v855 = vsel %vm442, %v853, %v851
        %v856 = vadd.f32 %v855, %v258
        %v857 = vadd.f32 %v854, %v259
        %v858 = vmax.f32 %v766, %v856
        %v859 = vmax.f32 %v767, %v857
        %860 = vrot.lane.b32.xlu0 %v766, 1
        %v861 = vpop.permute.xlu0 %860
        %862 = vrot.lane.b32.xlu0 %v767, 1
        %v863 = vpop.permute.xlu0 %862
        %v864 = vsel %vm453, %v861, %v863
        %v865 = vsel %vm453, %v863, %v861
        %v866 = vadd.f32 %v865, %v268
        %v867 = vadd.f32 %v864, %v269
        %v868 = vmax.f32 %v858, %v866
        %v869 = vmax.f32 %v859, %v867
        %870 = vrot.lane.b32.xlu0 %v766, 127
        %v871 = vpop.permute.xlu0 %870
        %872 = vrot.lane.b32.xlu0 %v767, 127
        %v873 = vpop.permute.xlu0 %872
        %v874 = vsel %vm464, %v871, %v873
        %v875 = vsel %vm464, %v873, %v871
        %v876 = vadd.f32 %v874, %v278
        %v877 = vadd.f32 %v875, %v279
        %v878 = vmax.f32 %v868, %v876
        %v879 = vmax.f32 %v869, %v877
        %880 = vrot.lane.b32.xlu0 %v766, 126
        %v881 = vpop.permute.xlu0 %880
        %882 = vrot.lane.b32.xlu0 %v767, 126
        %v883 = vpop.permute.xlu0 %882
        %v884 = vsel %vm475, %v881, %v883
        %v885 = vsel %vm475, %v883, %v881
        %v886 = vadd.f32 %v884, %v288
        %v887 = vadd.f32 %v885, %v289
        %v888 = vmax.f32 %v878, %v886
        %v889 = vmax.f32 %v879, %v887
        %890 = vrot.lane.b32.xlu0 %v888, 32
        %v891 = vpop.permute.xlu0 %890
        %892 = vrot.lane.b32.xlu0 %v889, 32
        %v893 = vpop.permute.xlu0 %892
        %v894 = vsel %vm486, %v891, %v893
        %v895 = vsel %vm486, %v893, %v891
        %v896 = vadd.f32 %v895, %v298
        %v897 = vadd.f32 %v894, %v299
        %v898 = vmax.f32 %v888, %v896
        %v899 = vmax.f32 %v889, %v897
        %900 = vrot.lane.b32.xlu0 %v888, 16
        %v901 = vpop.permute.xlu0 %900
        %902 = vrot.lane.b32.xlu0 %v889, 16
        %v903 = vpop.permute.xlu0 %902
        %v904 = vsel %vm497, %v901, %v903
        %v905 = vsel %vm497, %v903, %v901
        %v906 = vadd.f32 %v905, %v308
        %v907 = vadd.f32 %v904, %v309
        %v908 = vmax.f32 %v898, %v906
        %v909 = vmax.f32 %v899, %v907
        %910 = vrot.lane.b32.xlu0 %v888, 112
        %v911 = vpop.permute.xlu0 %910
        %912 = vrot.lane.b32.xlu0 %v889, 112
        %v913 = vpop.permute.xlu0 %912
        %v914 = vsel %vm508, %v911, %v913
        %v915 = vsel %vm508, %v913, %v911
        %v916 = vadd.f32 %v914, %v318
        %v917 = vadd.f32 %v915, %v319
        %v918 = vmax.f32 %v908, %v916
        %v919 = vmax.f32 %v909, %v917
        %920 = vrot.lane.b32.xlu0 %v888, 96
        %v921 = vpop.permute.xlu0 %920
        %922 = vrot.lane.b32.xlu0 %v889, 96
        %v923 = vpop.permute.xlu0 %922
        %v924 = vsel %vm519, %v921, %v923
        %v925 = vsel %vm519, %v923, %v921
        %v926 = vadd.f32 %v924, %v328
        %v927 = vadd.f32 %v925, %v329
        %v928 = vmax.f32 %v918, %v926
        %v929 = vmax.f32 %v919, %v927
        %v931 = vsel %vm526, %v437, 0
        %v934 = vsel %vm530, %v928, 0
        %v937 = vsel %vm530, %v929, 0
        %939 = vmatprep.subr.mxu0 %v937
        %940 = vmatpush1.msra.mxu0 %v934
        %941 = vmatprep.subr.mxu0 0.0
        %942 = vmatpush1.msra.mxu0 0.0
        %943 = vmatprep.subr.mxu0 0.0
        %944 = vmatpush1.msra.mxu0 0.0
        %945 = vmatprep.subr.mxu0 0.0
        %946 = vmatpush1.msra.mxu0 0.0
        %947 = vmatprep.subr.mxu0 0.0
        %948 = vmatpush1.msra.mxu0 0.0
        %949 = vmatprep.subr.mxu0 0.0
        %950 = vmatpush1.msra.mxu0 0.0
        %951 = vmatprep.subr.mxu0 0.0
        %952 = vmatpush1.msra.mxu0 0.0
        %953 = vmatprep.subr.mxu0 0.0
        %954 = vmatpush1.msra.mxu0 0.0
        %955 = vmatprep.subr.mxu0 0.0
        %956 = vmatpush1.msra.mxu0 0.0
        %957 = vmatprep.subr.mxu0 0.0
        %958 = vmatpush1.msra.mxu0 0.0
        %959 = vmatprep.subr.mxu0 0.0
        %960 = vmatpush1.msra.mxu0 0.0
        %961 = vmatprep.subr.mxu0 0.0
        %962 = vmatpush1.msra.mxu0 0.0
        %963 = vmatprep.subr.mxu0 0.0
        %964 = vmatpush1.msra.mxu0 0.0
        %965 = vmatprep.subr.mxu0 0.0
        %966 = vmatpush1.msra.mxu0 0.0
        %967 = vmatprep.subr.mxu0 0.0
        %968 = vmatpush1.msra.mxu0 0.0
        %969 = vmatprep.subr.mxu0 0.0
        %970 = vmatpush1.msra.mxu0 0.0
        %971 = vmatprep.subr.mxu0 0.0
        %972 = vmatpush1.msra.mxu0 0.0
        %973 = vmatprep.subr.mxu0 0.0
        %974 = vmatpush1.msra.mxu0 0.0
        %975 = vmatprep.subr.mxu0 0.0
        %976 = vmatpush1.msra.mxu0 0.0
        %977 = vmatprep.subr.mxu0 0.0
        %978 = vmatpush1.msra.mxu0 0.0
        %979 = vmatprep.subr.mxu0 0.0
        %980 = vmatpush1.msra.mxu0 0.0
        %981 = vmatprep.subr.mxu0 0.0
        %982 = vmatpush1.msra.mxu0 0.0
        %983 = vmatprep.subr.mxu0 0.0
        %984 = vmatpush1.msra.mxu0 0.0
        %985 = vmatprep.subr.mxu0 0.0
        %986 = vmatpush1.msra.mxu0 0.0
        %987 = vmatprep.subr.mxu0 0.0
        %988 = vmatpush1.msra.mxu0 0.0
        %989 = vmatprep.subr.mxu0 0.0
        %990 = vmatpush1.msra.mxu0 0.0
        %991 = vmatprep.subr.mxu0 0.0
        %992 = vmatpush1.msra.mxu0 0.0
        %993 = vmatprep.subr.mxu0 0.0
        %994 = vmatpush1.msra.mxu0 0.0
        %995 = vmatprep.subr.mxu0 0.0
        %996 = vmatpush1.msra.mxu0 0.0
        %997 = vmatprep.subr.mxu0 0.0
        %998 = vmatpush1.msra.mxu0 0.0
        %999 = vmatprep.subr.mxu0 0.0
        %1000 = vmatpush1.msra.mxu0 0.0
        %1001 = vmatprep.subr.mxu0 0.0
        %1002 = vmatpush1.msra.mxu0 0.0
        %1003 = vmatprep.mubr.f32.mxu0 0.0
        %1004 = vmatmul.mubr.f32.gmra.mrb[0].mxu0 %v931
        %v1005 = vpop.f32.mrb[0].mxu0
        %v1006 = vadd.f32 0.0, %v1005
        %v1007 = vpop.f32.mrb[0].mxu0
        %v1008 = vadd.f32 0.0, %v1007
        %1009 = vdwg.mxu0
        %v1010 = vadd.f32 %v848, %v1006
        %v1011 = vadd.f32 %v849, %v1008
        %v1012 = vld [vmem:[%s4] sm:$0xff]
        %1014 = vset.pattern.permute.xlu0 0
        %1015 = vperm.xlu0 %1014, %v1012
        %v1016 = vpop.permute.xlu0 %1015
        %v1018 = vadd.f32 %v1010, %v1016
        %v1019 = vadd.f32 %v1011, %v1016
        %v1020 = vxor.u32 %v1018, 2147483648
        %v1021 = vxor.u32 %v1019, 2147483648
        %v1022 = vmul.f32 %v1020, 1.442695
        %v1023 = vpow.pop %v1022
        %v1024 = vmul.f32 %v1021, 1.442695
        %v1025 = vpow.pop %v1024
        %v1026 = vadd.f32 %v1023, 1.0
        %v1027 = vadd.f32 %v1025, 1.0
        %v1028 = vrcp.pop %v1026
        %v1029 = vmul.f32 1.0, %v1028
        %v1030 = vrcp.pop %v1027
        %v1031 = vmul.f32 1.0, %v1030
        %v1032 = vmul.f32 %v1018, %v1029
        %v1033 = vmul.f32 %v1019, %v1031
        %1034 = vst [vmem:[%s217] sm:$0xff] %v1032
        %1035 = vst [vmem:[%s217 + $0x8] sm:$0xff] %v1033
        %s1036 = sand.u32 %s137, 1
        %s1037 = scalar_lea.sflag [#allocation3], %s1036
        %s1038 = sand.u32 %s137, 1
        %s1039 = smul.addr %s1038, 16
        %s1040 = scalar_lea.vmem [#allocation2], %s1039
        // Predicated region
        $region41: #{tpu_custom_call.1} parent=39 // pred_check
          %p1041 = pneg %p147
        $region42: #{tpu_custom_call.1} parent=39 // pred_check_branch
          %1043 = sbr.rel (%p1041) target = $region44
        $region43: #{tpu_custom_call.1} parent=39 // pred_region
          %s1045 = ssub.s32 256, 256
          %1046 = vsyncadd %s1037, %s1045
          %s1047 = smul.addr %s19, 2
          %s1048 = smul.addr %s1047, 128
          %s1049 = scalar_lea.hbm %s5, %s1048
          %s1051 = sshll.u32 %s1040, 4
          %s1052 = int_to_ptr.vmem [resolvable:$true] %s1051
          %1054 = dma.vmem_to_hbm [thread:$0]  %s1052, 256, %s1049, %s1037
        $region44: #{tpu_custom_call.1} parent=39 // pred_fallthru
          _
      $region40: #{tpu_custom_call.1} parent=5 // pred_fallthru
        _
      %p1055 = scmp.le.s32.totalorder 2, %s14
      // Predicated region
      $region45: #{tpu_custom_call.1} parent=5 // pred_check
        %p1056 = pneg %p1055
      $region46: #{tpu_custom_call.1} parent=5 // pred_check_branch
        %1058 = sbr.rel (%p1056) target = $region48
      $region47: #{tpu_custom_call.1} parent=5 // pred_region
        %s1059 = ssub.s32 %s14, 2
        // Predicated region
        $region49: #{tpu_custom_call.1} parent=47 // pred_check
          %p1060 = pneg %p153
        $region50: #{tpu_custom_call.1} parent=47 // pred_check_branch
          %1062 = sbr.rel (%p1060) target = $region52
        $region51: #{tpu_custom_call.1} parent=47 // pred_region
          %s1063 = sand.u32 %s138, 1
          %s1064 = scalar_lea.sflag [#allocation3], %s1063
          %s1065 = sand.u32 %s138, 1
          %s1066 = smul.addr %s1065, 16
          %s1067 = scalar_lea.vmem [#allocation2], %s1066
          %1068 = dma.done %s1064, 256
        $region52: #{tpu_custom_call.1} parent=47 // pred_fallthru
          _
      $region48: #{tpu_custom_call.1} parent=5 // pred_fallthru
        _
    $region6: #{tpu_custom_call.1} parent=1 // loop_footer
      %s18 = sadd.s32 1, %s14
    $region7: #{tpu_custom_call.1} parent=1 // loop_footer_branch
      %13 = sbr.rel target = $region3
    $region8: #{tpu_custom_call.1} parent=1 // loop_exit
      _
    %1069 = vsyncpa [#allocation3], 1
    %s1070 = scalar_lea.sflag [#allocation3], 1
    %1071 = vsyncpa %s1070, 1

</llo_original>
